<compile_context>
chip_gen: v5e
topology: v5e:2x2
jax: 0.10.0
libtpu: 0.0.40
codegen_flags: <defaults>
</compile_context>

<pallas_src>
import math
from collections import namedtuple

import jax
import jax.numpy as jnp
from jax import lax
from jax.experimental import pallas as pl
from jax.experimental.pallas import tpu as pltpu

# ---------------- module hyperparameters (match the PyTorch __init__) ----------------
WORD_SIZE = 50
EMBED_DIM = 32
NUM_HEADS = 8
NUM_UNITS = NUM_HEADS * NUM_HEADS     # 64; required by the re-merge in the forward
CLASSES = 16
PADDING_IDX = 0

HEAD_DIM = NUM_HEADS                  # torch.split uses num_heads as the chunk SIZE
NUM_CHUNKS = NUM_UNITS // HEAD_DIM    # number of attention "chunks" actually produced
assert NUM_UNITS == NUM_HEADS ** 2    # needed for the PyTorch re-merge to type-check

# ---------------- packed constant-slab layout (built once, outside the call path) ----
VOCAB_PAD = 64                        # WORD_SIZE rounded up (sublane friendly)
LANES = 3 * 128                       # q / k / v columns each on their own 128-lane tile
Q_OFF, K_OFF, V_OFF = 0, 128, 256

Layout = namedtuple("Layout", ["r_wf", "r_bf", "r_vm", "r_cm", "rows"])


def _round8(x):
    return (x + 7) // 8 * 8


def _layout(batch, seq):
    bs = batch * seq
    cbs = NUM_CHUNKS * bs
    r_wf = VOCAB_PAD                  # fc weight rows
    r_bf = r_wf + NUM_UNITS           # fc bias row
    r_vm = r_bf + 8                   # batch-validity mask rows (bs, cbs)
    r_cm = r_vm + _round8(bs)         # chunk mask rows (cbs, NUM_UNITS)
    rows = r_cm + _round8(cbs)
    return Layout(r_wf, r_bf, r_vm, r_cm, rows)


def pack_params(params, batch, seq):
    """Pack ALL constants for a given (batch, seq) into ONE lane-padded f32 slab.

    Done once, outside the per-call path (collapses 6 per-call DMAs into 1 and hoists
    the weight concat / embedding projection out of the kernel's critical path).
    """
    emb, wq, bq, wk, bk, wv, bv, wf, bf = params
    bs = batch * seq
    cbs = NUM_CHUNKS * bs
    lay = _layout(batch, seq)

    # Gathering a row of (emb @ W + b) is exactly embed(token) -> Linear, so the
    # embedding lookup and the Q/K/V projections are fused at pack time.
    with jax.default_matmul_precision("highest"):
        eq = emb @ wq + bq            # (V, U)
        ek = emb @ wk + bk
        ev = emb @ wv + bv

    # 0/1 helper masks for the "wide" block-diagonal attention.
    row_chunk = jnp.arange(cbs) // bs                  # chunk id of each wide column / K_big row
    col_chunk = jnp.arange(NUM_UNITS) // HEAD_DIM      # chunk id of each unit column
    chunk_mask = (row_chunk[:, None] == col_chunk[None, :]).astype(jnp.float32)   # (cbs, U)

    t_batch = jnp.arange(bs) // seq                    # batch id of query token t
    tp_batch = (jnp.arange(cbs) % bs) // seq           # batch id of key token t' per group
    valid_mask = (t_batch[:, None] == tp_batch[None, :]).astype(jnp.float32)      # (bs, cbs)

    slab = jnp.zeros((lay.rows, LANES), jnp.float32)
    slab = slab.at[:WORD_SIZE, Q_OFF:Q_OFF + NUM_UNITS].set(eq)
    slab = slab.at[:WORD_SIZE, K_OFF:K_OFF + NUM_UNITS].set(ek)
    slab = slab.at[:WORD_SIZE, V_OFF:V_OFF + NUM_UNITS].set(ev)
    slab = slab.at[lay.r_wf:lay.r_wf + NUM_UNITS, :CLASSES].set(wf)
    slab = slab.at[lay.r_bf, :CLASSES].set(bf[0])
    slab = slab.at[lay.r_vm:lay.r_vm + bs, :cbs].set(valid_mask)
    slab = slab.at[lay.r_cm:lay.r_cm + cbs, :NUM_UNITS].set(chunk_mask)
    return slab


def _make_kernel(batch, seq):
    """Kernel factory: closes over static batch / seq only via Python scalars."""
    bs = batch * seq                  # flattened tokens
    cbs = NUM_CHUNKS * bs             # "wide" attention columns (= 128 for B=2, S=8)
    lay = _layout(batch, seq)
    scale = 1.0 / math.sqrt(seq)      # PyTorch: score / k_.shape[1] ** 0.5
    HIGH = lax.Precision.HIGHEST

    def kernel(ids_ref, slab_ref, out_ref):
        # ---- fused embedding gather + QKV projection: one one-hot MXU matmul ----
        ids = ids_ref[...]                                               # (bs, 1) int32
        vocab = lax.broadcasted_iota(jnp.int32, (bs, VOCAB_PAD), 1)
        onehot = (vocab == ids).astype(jnp.float32)                      # (bs, VOCAB_PAD)
        qkv = jnp.dot(onehot, slab_ref[0:VOCAB_PAD, :],
                      precision=HIGH, preferred_element_type=jnp.float32)  # (bs, 384)

        q = qkv[:, Q_OFF:Q_OFF + NUM_UNITS]                              # (bs, 64)
        k = qkv[:, K_OFF:K_OFF + NUM_UNITS]
        v = qkv[:, V_OFF:V_OFF + NUM_UNITS]

        # ---- "wide" block-diagonal attention (no transposes / split-cat relayouts) ----
        chunk_mask = slab_ref[lay.r_cm:lay.r_cm + cbs, 0:NUM_UNITS]      # (cbs, 64) 0/1
        valid_mask = slab_ref[lay.r_vm:lay.r_vm + bs, 0:cbs]             # (bs, cbs) 0/1

        k_big = jnp.concatenate([k] * NUM_CHUNKS, axis=0) * chunk_mask   # (cbs, 64)
        v_big = jnp.concatenate([v] * NUM_CHUNKS, axis=0) * chunk_mask   # (cbs, 64)

        # scores[t, c*bs + t'] = (1/sqrt(S)) * sum_h q[t, c*H+h] * k[t', c*H+h]
        scores = lax.dot_general(q * scale, k_big, (((1,), (1,)), ((), ())),
                                 precision=HIGH,
                                 preferred_element_type=jnp.float32)     # (bs, cbs)
        # per-row shift is constant within every softmax group -> mathematically exact
        scores = scores - jnp.max(scores, axis=-1, keepdims=True)
        e = jnp.exp(scores) * valid_mask                                 # zero cross-batch pairs

        # numerator = sum_t' p*v per chunk; denominator broadcast back to unit columns;
        # this also performs the chunk re-merge directly in (bs, U) layout.
        num = jnp.dot(e, v_big, precision=HIGH,
                      preferred_element_type=jnp.float32)                # (bs, 64)
        den = jnp.dot(e, chunk_mask, precision=HIGH,
                      preferred_element_type=jnp.float32)                # (bs, 64)
        attn = num / den
        o = attn + q                                                     # residual: unsplit q

        # ---- sum over the sequence axis, fc, softmax ----
        osum = jnp.sum(o.reshape(batch, seq, NUM_UNITS), axis=1)         # (batch, 64)
        wf = slab_ref[lay.r_wf:lay.r_wf + NUM_UNITS, 0:CLASSES]          # (64, CLASSES)
        bf = slab_ref[lay.r_bf:lay.r_bf + 1, 0:CLASSES]                  # (1, CLASSES)
        logits = jnp.dot(osum, wf, precision=HIGH,
                         preferred_element_type=jnp.float32) + bf
        logits = logits - jnp.max(logits, axis=-1, keepdims=True)
        pz = jnp.exp(logits)
        out_ref[...] = (pz / jnp.sum(pz, axis=-1, keepdims=True)).astype(out_ref.dtype)

    return kernel


def multi_head_attention(inputs, slab):
    """inputs: (B, S) int token ids; slab: packed constants from pack_params(params, B, S)."""
    B, S = inputs.shape
    lay = _layout(B, S)
    assert slab.shape == (lay.rows, LANES), "slab was packed for a different (batch, seq)"
    ids = inputs.reshape(B * S, 1).astype(jnp.int32)   # tiny metadata reshape

    return pl.pallas_call(
        _make_kernel(B, S),
        out_shape=jax.ShapeDtypeStruct((B, CLASSES), jnp.float32),
        grid=(1,),                                      # whole (tiny) problem in one step
        in_specs=[
            pl.BlockSpec((B * S, 1), lambda i: (0, 0)),       # token ids (tiny int32)
            pl.BlockSpec((lay.rows, LANES), lambda i: (0, 0)),  # all constants: ONE DMA
        ],
        out_specs=pl.BlockSpec((B, CLASSES), lambda i: (0, 0)),
        # At larger batch: tile B over a leading "parallel" grid axis (2 TCs on v7x),
        # keep the wide dim a multiple of 128/256, and set vmem_limit_bytes per chip gen.
        compiler_params=pltpu.CompilerParams(dimension_semantics=("arbitrary",)),
    )(ids, slab)


def reference(inputs, params):
    """Pure-JAX transcription of the PyTorch forward, for a sanity check."""
    emb_table, wq, bq, wk, bk, wv, bv, wf, bf = params
    with jax.default_matmul_precision("highest"):
        e = jnp.take(emb_table, inputs, axis=0)
        q = e @ wq + bq
        k = e @ wk + bk
        v = e @ wv + bv

        def split_cat(x):  # split into chunks of size NUM_HEADS on last dim, cat on dim 0
            return jnp.concatenate(
                [x[..., i * HEAD_DIM:(i + 1) * HEAD_DIM] for i in range(NUM_CHUNKS)], axis=0)

        q_, k_, v_ = split_cat(q), split_cat(k), split_cat(v)
        s = jnp.einsum('bqd,bkd->bqk', q_, k_) / math.sqrt(k_.shape[1])
        p = jax.nn.softmax(s, axis=-1)
        o = jnp.einsum('bqk,bkd->bqd', p, v_)
        B = q.shape[0]
        o = jnp.concatenate([o[i * B:(i + 1) * B] for i in range(o.shape[0] // B)], axis=-1)
        o = o + q
        o = o.sum(axis=1)
        return jax.nn.softmax(o @ wf + bf, axis=-1)


def init_params(key):
    ks = jax.random.split(key, 9)
    emb = jax.random.normal(ks[0], (WORD_SIZE, EMBED_DIM), jnp.float32)
    emb = emb.at[PADDING_IDX].set(0.0)  # nn.Embedding padding_idx semantics
    lim_e = 1.0 / math.sqrt(EMBED_DIM)
    lim_u = 1.0 / math.sqrt(NUM_UNITS)
    wq = jax.random.uniform(ks[1], (EMBED_DIM, NUM_UNITS), jnp.float32, -lim_e, lim_e)
    bq = jax.random.uniform(ks[2], (1, NUM_UNITS), jnp.float32, -lim_e, lim_e)
    wk = jax.random.uniform(ks[3], (EMBED_DIM, NUM_UNITS), jnp.float32, -lim_e, lim_e)
    bk = jax.random.uniform(ks[4], (1, NUM_UNITS), jnp.float32, -lim_e, lim_e)
    wv = jax.random.uniform(ks[5], (EMBED_DIM, NUM_UNITS), jnp.float32, -lim_e, lim_e)
    bv = jax.random.uniform(ks[6], (1, NUM_UNITS), jnp.float32, -lim_e, lim_e)
    wf = jax.random.uniform(ks[7], (NUM_UNITS, CLASSES), jnp.float32, -lim_u, lim_u)
    bf = jax.random.uniform(ks[8], (1, CLASSES), jnp.float32, -lim_u, lim_u)
    return (emb, wq, bq, wk, bk, wv, bv, wf, bf)


if __name__ == "__main__":
    key = jax.random.PRNGKey(0)
    pkey, ikey = jax.random.split(key)
    params = init_params(pkey)

    B, S = 2, 8
    inputs = jax.random.randint(ikey, (B, S), 0, WORD_SIZE, dtype=jnp.int32)
    inputs = inputs.at[0, -1].set(PADDING_IDX)  # exercise the padding_idx row

    slab = pack_params(params, B, S)            # packed ONCE, outside the call path
    out = multi_head_attention(inputs, slab)
    out = jax.block_until_ready(out)

    ref = reference(inputs, params)
    assert out.shape == (B, CLASSES)
    err = float(jnp.max(jnp.abs(out - ref)))
    assert jnp.allclose(out, ref, atol=1e-4, rtol=1e-4), (
        f"Pallas output mismatch vs reference (max abs err = {err})")

    print("KERNEL_OK")
</pallas_src>

<mosaic_0001>
module attributes {stable_mosaic.version = 11 : i64} {
  func.func @kernel(%arg0: i32, %arg1: memref<16x1xi32, #tpu.memory_space<vmem>>, %arg2: memref<280x384xf32, #tpu.memory_space<vmem>>, %arg3: memref<2x16xf32, #tpu.memory_space<vmem>>) attributes {dimension_semantics = [#tpu.dimension_semantics<arbitrary>], iteration_bounds = array<i64: 1>, scalar_prefetch = 0 : i64, scratch_operands = 0 : i64, tpu.core_type = #tpu.core_type<tc>, window_params = [{pipeline_mode = #tpu.pipeline_mode<synchronous>, transform_indices = @transform_0, window_bounds = array<i64: 16, 1>}, {pipeline_mode = #tpu.pipeline_mode<synchronous>, transform_indices = @transform_1, window_bounds = array<i64: 280, 384>}, {pipeline_mode = #tpu.pipeline_mode<synchronous>, transform_indices = @transform_2, window_bounds = array<i64: 2, 16>}]} {
    %c0 = arith.constant 0 : index
    %c0_0 = arith.constant 0 : index
    %0 = vector.load %arg1[%c0, %c0_0] : memref<16x1xi32, #tpu.memory_space<vmem>>, vector<16x1xi32>
    %1 = tpu.iota {dimensions = array<i32: 1>} : vector<16x64xi32>
    %2 = vector.broadcast %0 : vector<16x1xi32> to vector<16x64xi32>
    %3 = arith.cmpi eq, %1, %2 : vector<16x64xi32>
    %4 = arith.extui %3 : vector<16x64xi1> to vector<16x64xi32>
    %5 = arith.sitofp %4 : vector<16x64xi32> to vector<16x64xf32>
    %c0_1 = arith.constant 0 : index
    %c0_2 = arith.constant 0 : index
    %6 = vector.load %arg2[%c0_1, %c0_2] : memref<280x384xf32, #tpu.memory_space<vmem>>, vector<64x384xf32>
    %cst = arith.constant dense<0.000000e+00> : vector<16x384xf32>
    %7 = tpu.matmul %5, %6, %cst {dimension_numbers = #tpu.dot_dimension_numbers<[1], [0], [0], [1], [0, 0, 1, 1], [], []>, precision = #tpu.contract_precision<fp32>} : vector<16x64xf32>, vector<64x384xf32>, vector<16x384xf32> -> vector<16x384xf32>
    %8 = vector.extract_strided_slice %7 {offsets = [0, 0], sizes = [16, 64], strides = [1, 1]} : vector<16x384xf32> to vector<16x64xf32>
    %9 = vector.extract_strided_slice %7 {offsets = [0, 128], sizes = [16, 64], strides = [1, 1]} : vector<16x384xf32> to vector<16x64xf32>
    %10 = vector.extract_strided_slice %7 {offsets = [0, 256], sizes = [16, 64], strides = [1, 1]} : vector<16x384xf32> to vector<16x64xf32>
    %c152 = arith.constant 152 : index
    %c0_3 = arith.constant 0 : index
    %11 = vector.load %arg2[%c152, %c0_3] : memref<280x384xf32, #tpu.memory_space<vmem>>, vector<128x64xf32>
    %c136 = arith.constant 136 : index
    %c0_4 = arith.constant 0 : index
    %12 = vector.load %arg2[%c136, %c0_4] : memref<280x384xf32, #tpu.memory_space<vmem>>, vector<16x128xf32>
    %13 = tpu.concatenate %9, %9, %9, %9, %9, %9, %9, %9 in 0 : vector<16x64xf32>, vector<16x64xf32>, vector<16x64xf32>, vector<16x64xf32>, vector<16x64xf32>, vector<16x64xf32>, vector<16x64xf32>, vector<16x64xf32> -> vector<128x64xf32>
    %14 = arith.mulf %13, %11 : vector<128x64xf32>
    %15 = tpu.concatenate %10, %10, %10, %10, %10, %10, %10, %10 in 0 : vector<16x64xf32>, vector<16x64xf32>, vector<16x64xf32>, vector<16x64xf32>, vector<16x64xf32>, vector<16x64xf32>, vector<16x64xf32>, vector<16x64xf32> -> vector<128x64xf32>
    %16 = arith.mulf %15, %11 : vector<128x64xf32>
    %cst_5 = arith.constant 0.353553385 : f32
    %17 = vector.broadcast %cst_5 : f32 to vector<16x64xf32>
    %18 = arith.mulf %8, %17 : vector<16x64xf32>
    %cst_6 = arith.constant dense<0.000000e+00> : vector<16x128xf32>
    %19 = tpu.matmul %18, %14, %cst_6 {dimension_numbers = #tpu.dot_dimension_numbers<[1], [1], [0], [0], [0, 0, 1, 0], [], []>, precision = #tpu.contract_precision<fp32>} : vector<16x64xf32>, vector<128x64xf32>, vector<16x128xf32> -> vector<16x128xf32>
    %cst_7 = arith.constant dense<0xFF800000> : vector<16xf32>
    %20 = vector.multi_reduction <maximumf>, %19, %cst_7 [1] : vector<16x128xf32> to vector<16xf32>
    %21 = vector.shape_cast %20 : vector<16xf32> to vector<16x1xf32>
    %22 = vector.broadcast %21 : vector<16x1xf32> to vector<16x128xf32>
    %23 = arith.subf %19, %22 : vector<16x128xf32>
    %24 = math.exp %23 : vector<16x128xf32>
    %25 = arith.mulf %24, %12 : vector<16x128xf32>
    %cst_8 = arith.constant dense<0.000000e+00> : vector<16x64xf32>
    %26 = tpu.matmul %25, %16, %cst_8 {dimension_numbers = #tpu.dot_dimension_numbers<[1], [0], [0], [1], [0, 0, 1, 1], [], []>, precision = #tpu.contract_precision<fp32>} : vector<16x128xf32>, vector<128x64xf32>, vector<16x64xf32> -> vector<16x64xf32>
    %cst_9 = arith.constant dense<0.000000e+00> : vector<16x64xf32>
    %27 = tpu.matmul %25, %11, %cst_9 {dimension_numbers = #tpu.dot_dimension_numbers<[1], [0], [0], [1], [0, 0, 1, 1], [], []>, precision = #tpu.contract_precision<fp32>} : vector<16x128xf32>, vector<128x64xf32>, vector<16x64xf32> -> vector<16x64xf32>
    %28 = arith.divf %26, %27 : vector<16x64xf32>
    %29 = arith.addf %28, %8 : vector<16x64xf32>
    %30 = vector.shape_cast %29 : vector<16x64xf32> to vector<2x8x64xf32>
    %cst_10 = arith.constant dense<0.000000e+00> : vector<2x64xf32>
    %31 = vector.multi_reduction <add>, %30, %cst_10 [1] : vector<2x8x64xf32> to vector<2x64xf32>
    %c64 = arith.constant 64 : index
    %c0_11 = arith.constant 0 : index
    %32 = vector.load %arg2[%c64, %c0_11] : memref<280x384xf32, #tpu.memory_space<vmem>>, vector<64x16xf32>
    %c128 = arith.constant 128 : index
    %c0_12 = arith.constant 0 : index
    %33 = vector.load %arg2[%c128, %c0_12] : memref<280x384xf32, #tpu.memory_space<vmem>>, vector<1x16xf32>
    %cst_13 = arith.constant dense<0.000000e+00> : vector<2x16xf32>
    %34 = tpu.matmul %31, %32, %cst_13 {dimension_numbers = #tpu.dot_dimension_numbers<[1], [0], [0], [1], [0, 0, 1, 1], [], []>, precision = #tpu.contract_precision<fp32>} : vector<2x64xf32>, vector<64x16xf32>, vector<2x16xf32> -> vector<2x16xf32>
    %35 = vector.broadcast %33 : vector<1x16xf32> to vector<2x16xf32>
    %36 = arith.addf %34, %35 : vector<2x16xf32>
    %cst_14 = arith.constant dense<0xFF800000> : vector<2xf32>
    %37 = vector.multi_reduction <maximumf>, %36, %cst_14 [1] : vector<2x16xf32> to vector<2xf32>
    %38 = vector.shape_cast %37 : vector<2xf32> to vector<2x1xf32>
    %39 = vector.broadcast %38 : vector<2x1xf32> to vector<2x16xf32>
    %40 = arith.subf %36, %39 : vector<2x16xf32>
    %41 = math.exp %40 : vector<2x16xf32>
    %cst_15 = arith.constant dense<0.000000e+00> : vector<2xf32>
    %42 = vector.multi_reduction <add>, %41, %cst_15 [1] : vector<2x16xf32> to vector<2xf32>
    %43 = vector.shape_cast %42 : vector<2xf32> to vector<2x1xf32>
    %44 = vector.broadcast %43 : vector<2x1xf32> to vector<2x16xf32>
    %45 = arith.divf %41, %44 : vector<2x16xf32>
    %c0_16 = arith.constant 0 : index
    %c0_17 = arith.constant 0 : index
    %46 = vector.load %arg3[%c0_16, %c0_17] : memref<2x16xf32, #tpu.memory_space<vmem>>, vector<2x16xf32>
    tpu.vector_store %arg3[%c0_16, %c0_17], %45 {strides = array<i32>} : memref<2x16xf32, #tpu.memory_space<vmem>>, vector<2x16xf32>,
    return
  }
  func.func @transform_0(%arg0: i32) -> (i32, i32) {
    %c0_i32 = arith.constant 0 : i32
    %c0_i32_0 = arith.constant 0 : i32
    %c0_i32_1 = arith.constant 0 : i32
    return %c0_i32, %c0_i32_0 : i32, i32
  }
  func.func @transform_1(%arg0: i32) -> (i32, i32) {
    %c0_i32 = arith.constant 0 : i32
    %c0_i32_0 = arith.constant 0 : i32
    %c0_i32_1 = arith.constant 0 : i32
    return %c0_i32, %c0_i32_0 : i32, i32
  }
  func.func @transform_2(%arg0: i32) -> (i32, i32) {
    %c0_i32 = arith.constant 0 : i32
    %c0_i32_0 = arith.constant 0 : i32
    %c0_i32_1 = arith.constant 0 : i32
    return %c0_i32, %c0_i32_0 : i32, i32
  }
}

</mosaic_0001>

<llo_original>
// kernel: tpu_custom_call.1
$region0: #{tpu_custom_call.1}
  #allocation0 [shape = 'u32[]', space=smem, size = 0x4, offset = 0x4, fixed_abs, tag = 'smem constant byte address 0x4 - core index']
  #allocation1 [shape = 'u32[72,128]{1,0:T(1,128)}', space=vmem, size = 0x9000, scoped, tag = 'internal scratch']
  %s0 = inlined_call_operand.vmem [shape: s32[16,1], index: 0, kind: input, shape index: {}]
  %s1 = inlined_call_operand.hbm [shape: f32[280,384], index: 1, kind: input, shape index: {}]
  %s2 = inlined_call_operand.hbm [shape: f32[2,16], index: 2, kind: output, shape index: {}]
  %s3 = sld [smem:[#allocation0]]
  $region22: #{tpu_custom_call.1} parent=0
    _
  %s5 = ssub.s32 1, %s3
  %s6 = scalar_select 0, %s5, %s3
  $region1: #{tpu_custom_call.1} parent=0
    #allocation2 [shape = 'u8[430080]{0}', space=vmem, size = 0x69000, scoped, tag = 'input window, operand 1, single buffered']
    #allocation3 [shape = 's32[1]{0}', space=sflag, size = 0x4, scoped, tag = 'scoped memory for tpu_custom_call.1']
    #allocation4 [shape = 's32[1]{0}', space=sflag, size = 0x4, scoped, tag = 'scoped memory for tpu_custom_call.1']
    #allocation5 [shape = 'u8[1024]{0}', space=vmem, size = 0x400, scoped, tag = 'output window, operand 0, single buffered']
    %7 = vsyncpa [#allocation3], 0
    %8 = vsyncpa [#allocation4], 0
    // Predicated region
    $region2: #{tpu_custom_call.1} parent=1 // pred_check
      _
    $region3: #{tpu_custom_call.1} parent=1 // pred_check_branch
      %10 = sbr.rel (0) target = $region5
    $region4: #{tpu_custom_call.1} parent=1 // pred_region
      _
    $region5: #{tpu_custom_call.1} parent=1 // pred_fallthru
      _
    // Predicated region
    $region6: #{tpu_custom_call.1} parent=1 // pred_check
      _
    $region7: #{tpu_custom_call.1} parent=1 // pred_check_branch
      %12 = sbr.rel (0) target = $region9
    $region8: #{tpu_custom_call.1} parent=1 // pred_region
      %14 = vsyncadd [#allocation3], 0
      %s15 = sshll.u32 %s1, 4
      %s16 = int_to_ptr.hbm [resolvable:$true] %s15
      %s17 = sshll.u32 [#allocation2], 4
      %s18 = int_to_ptr.vmem [resolvable:$true] %s17
      %23 = dma.hbm_to_vmem [thread:$0]  %s16, 13440, %s18, [#allocation3], 384, 384, 24
    $region9: #{tpu_custom_call.1} parent=1 // pred_fallthru
      _
    // Predicated region
    $region10: #{tpu_custom_call.1} parent=1 // pred_check
      _
    $region11: #{tpu_custom_call.1} parent=1 // pred_check_branch
      %25 = sbr.rel (0) target = $region13
    $region12: #{tpu_custom_call.1} parent=1 // pred_region
      %27 = dma.done [#allocation3], 13440
    $region13: #{tpu_custom_call.1} parent=1 // pred_fallthru
      _
    %v28 = vld [vmem:[%s0] sm:$0xff]
    %v29 = vld [vmem:[%s0 + $0x8] sm:$0xff]
    %v30 = vlaneseq
    %v31 = vand.u32 %v30, 127
    %32 = vset.pattern.permute.xlu0 0
    %33 = vperm.xlu0 %32, %v28
    %v34 = vpop.permute.xlu0 %33
    %35 = vset.pattern.permute.xlu0 0
    %36 = vperm.xlu0 %35, %v29
    %v37 = vpop.permute.xlu0 %36
    %vm38 = vcmp.eq.s32.totalorder %v31, %v34
    %vm39 = vcmp.eq.s32.totalorder %v31, %v37
    %v40 = vsel %vm38, 1, 0
    %v41 = vsel %vm39, 1, 0
    %v42 = vcvt.s32.f32 %v40
    %v43 = vcvt.s32.f32 %v41
    %v44 = vld [vmem:[#allocation2] sm:$0xff]
    %v45 = vld [vmem:[#allocation2 + $0x8] sm:$0xff]
    %v46 = vld [vmem:[#allocation2 + $0x10] sm:$0xff]
    %v47 = vld [vmem:[#allocation2 + $0x18] sm:$0xff]
    %v48 = vld [vmem:[#allocation2 + $0x20] sm:$0xff]
    %v49 = vld [vmem:[#allocation2 + $0x28] sm:$0xff]
    %v50 = vld [vmem:[#allocation2 + $0x30] sm:$0xff]
    %v51 = vld [vmem:[#allocation2 + $0x38] sm:$0xff]
    %v52 = vld [vmem:[#allocation2 + $0x40] sm:$0xff]
    %v53 = vld [vmem:[#allocation2 + $0x48] sm:$0xff]
    %v54 = vld [vmem:[#allocation2 + $0x50] sm:$0xff]
    %v55 = vld [vmem:[#allocation2 + $0x58] sm:$0xff]
    %v56 = vld [vmem:[#allocation2 + $0x60] sm:$0xff]
    %v57 = vld [vmem:[#allocation2 + $0x68] sm:$0xff]
    %v58 = vld [vmem:[#allocation2 + $0x70] sm:$0xff]
    %v59 = vld [vmem:[#allocation2 + $0x78] sm:$0xff]
    %v60 = vld [vmem:[#allocation2 + $0x80] sm:$0xff]
    %v61 = vld [vmem:[#allocation2 + $0x88] sm:$0xff]
    %v62 = vld [vmem:[#allocation2 + $0x90] sm:$0xff]
    %v63 = vld [vmem:[#allocation2 + $0x98] sm:$0xff]
    %v64 = vld [vmem:[#allocation2 + $0xa0] sm:$0xff]
    %v65 = vld [vmem:[#allocation2 + $0xa8] sm:$0xff]
    %v66 = vld [vmem:[#allocation2 + $0xb0] sm:$0xff]
    %v67 = vld [vmem:[#allocation2 + $0xb8] sm:$0xff]
    %vm68 = vcmask 523264
    %v70 = vsel %vm68, %v42, 0
    %v73 = vsel %vm68, %v43, 0
    %75 = vmatpush.msra.mxu0 0.0
    %76 = vmatpush.msra.mxu0 0.0
    %77 = vmatpush.msra.mxu0 0.0
    %78 = vmatpush.msra.mxu0 0.0
    %79 = vmatpush.msra.mxu0 0.0
    %80 = vmatpush.msra.mxu0 0.0
    %81 = vmatpush.msra.mxu0 0.0
    %82 = vmatpush.msra.mxu0 0.0
    %v83 = vand.u32 %v65, 4294901760
    %84 = vmatpush.msra.mxu0 %v83
    %v85 = vand.u32 %v62, 4294901760
    %86 = vmatpush.msra.mxu0 %v85
    %v87 = vand.u32 %v59, 4294901760
    %88 = vmatpush.msra.mxu0 %v87
    %v89 = vand.u32 %v56, 4294901760
    %90 = vmatpush.msra.mxu0 %v89
    %v91 = vand.u32 %v53, 4294901760
    %92 = vmatpush.msra.mxu0 %v91
    %v93 = vand.u32 %v50, 4294901760
    %94 = vmatpush.msra.mxu0 %v93
    %v95 = vand.u32 %v47, 4294901760
    %96 = vmatpush.msra.mxu0 %v95
    %v97 = vand.u32 %v44, 4294901760
    %98 = vmatpush.msra.mxu0 %v97
    %v99 = vand.u32 %v70, 4294901760
    %v100 = vsub.f32 %v70, %v99
    %v101 = vand.u32 %v100, 4294901760
    %v102 = vsub.f32 %v100, %v101
    %v103 = vand.u32 %v102, 4294901760
    %104 = vmatmul.f32.gmra.mxu0 %v103
    %v105 = vpop.f32.mrf.mxu0
    %v106 = vadd.f32 0.0, %v105
    %v107 = vand.u32 %v73, 4294901760
    %v108 = vsub.f32 %v73, %v107
    %v109 = vand.u32 %v108, 4294901760
    %v110 = vsub.f32 %v108, %v109
    %v111 = vand.u32 %v110, 4294901760
    %112 = vmatmul.f32.gmra.mxu0 %v111
    %v113 = vpop.f32.mrf.mxu0
    %v114 = vadd.f32 0.0, %v113
    %115 = vdwg.mxu0
    %116 = vmatpush.msra.mxu0 0.0
    %117 = vmatpush.msra.mxu0 0.0
    %118 = vmatpush.msra.mxu0 0.0
    %119 = vmatpush.msra.mxu0 0.0
    %120 = vmatpush.msra.mxu0 0.0
    %121 = vmatpush.msra.mxu0 0.0
    %122 = vmatpush.msra.mxu0 0.0
    %123 = vmatpush.msra.mxu0 0.0
    %v124 = vand.u32 %v65, 4294901760
    %v125 = vsub.f32 %v65, %v124
    %v126 = vand.u32 %v125, 4294901760
    %v127 = vsub.f32 %v125, %v126
    %v128 = vand.u32 %v127, 4294901760
    %129 = vmatpush.msra.mxu0 %v128
    %v130 = vand.u32 %v62, 4294901760
    %v131 = vsub.f32 %v62, %v130
    %v132 = vand.u32 %v131, 4294901760
    %v133 = vsub.f32 %v131, %v132
    %v134 = vand.u32 %v133, 4294901760
    %135 = vmatpush.msra.mxu0 %v134
    %v136 = vand.u32 %v59, 4294901760
    %v137 = vsub.f32 %v59, %v136
    %v138 = vand.u32 %v137, 4294901760
    %v139 = vsub.f32 %v137, %v138
    %v140 = vand.u32 %v139, 4294901760
    %141 = vmatpush.msra.mxu0 %v140
    %v142 = vand.u32 %v56, 4294901760
    %v143 = vsub.f32 %v56, %v142
    %v144 = vand.u32 %v143, 4294901760
    %v145 = vsub.f32 %v143, %v144
    %v146 = vand.u32 %v145, 4294901760
    %147 = vmatpush.msra.mxu0 %v146
    %v148 = vand.u32 %v53, 4294901760
    %v149 = vsub.f32 %v53, %v148
    %v150 = vand.u32 %v149, 4294901760
    %v151 = vsub.f32 %v149, %v150
    %v152 = vand.u32 %v151, 4294901760
    %153 = vmatpush.msra.mxu0 %v152
    %v154 = vand.u32 %v50, 4294901760
    %v155 = vsub.f32 %v50, %v154
    %v156 = vand.u32 %v155, 4294901760
    %v157 = vsub.f32 %v155, %v156
    %v158 = vand.u32 %v157, 4294901760
    %159 = vmatpush.msra.mxu0 %v158
    %v160 = vand.u32 %v47, 4294901760
    %v161 = vsub.f32 %v47, %v160
    %v162 = vand.u32 %v161, 4294901760
    %v163 = vsub.f32 %v161, %v162
    %v164 = vand.u32 %v163, 4294901760
    %165 = vmatpush.msra.mxu0 %v164
    %v166 = vand.u32 %v44, 4294901760
    %v167 = vsub.f32 %v44, %v166
    %v168 = vand.u32 %v167, 4294901760
    %v169 = vsub.f32 %v167, %v168
    %v170 = vand.u32 %v169, 4294901760
    %171 = vmatpush.msra.mxu0 %v170
    %v172 = vand.u32 %v70, 4294901760
    %173 = vmatmul.f32.gmra.mxu0 %v172
    %v174 = vpop.f32.mrf.mxu0
    %v175 = vadd.f32 %v106, %v174
    %v176 = vand.u32 %v73, 4294901760
    %177 = vmatmul.f32.gmra.mxu0 %v176
    %v178 = vpop.f32.mrf.mxu0
    %v179 = vadd.f32 %v114, %v178
    %180 = vdwg.mxu0
    %181 = vmatpush.msra.mxu0 0.0
    %182 = vmatpush.msra.mxu0 0.0
    %183 = vmatpush.msra.mxu0 0.0
    %184 = vmatpush.msra.mxu0 0.0
    %185 = vmatpush.msra.mxu0 0.0
    %186 = vmatpush.msra.mxu0 0.0
    %187 = vmatpush.msra.mxu0 0.0
    %188 = vmatpush.msra.mxu0 0.0
    %v189 = vand.u32 %v65, 4294901760
    %v190 = vsub.f32 %v65, %v189
    %191 = vmatpush.msra.mxu0 %v190
    %v192 = vand.u32 %v62, 4294901760
    %v193 = vsub.f32 %v62, %v192
    %194 = vmatpush.msra.mxu0 %v193
    %v195 = vand.u32 %v59, 4294901760
    %v196 = vsub.f32 %v59, %v195
    %197 = vmatpush.msra.mxu0 %v196
    %v198 = vand.u32 %v56, 4294901760
    %v199 = vsub.f32 %v56, %v198
    %200 = vmatpush.msra.mxu0 %v199
    %v201 = vand.u32 %v53, 4294901760
    %v202 = vsub.f32 %v53, %v201
    %203 = vmatpush.msra.mxu0 %v202
    %v204 = vand.u32 %v50, 4294901760
    %v205 = vsub.f32 %v50, %v204
    %206 = vmatpush.msra.mxu0 %v205
    %v207 = vand.u32 %v47, 4294901760
    %v208 = vsub.f32 %v47, %v207
    %209 = vmatpush.msra.mxu0 %v208
    %v210 = vand.u32 %v44, 4294901760
    %v211 = vsub.f32 %v44, %v210
    %212 = vmatpush.msra.mxu0 %v211
    %v213 = vand.u32 %v70, 4294901760
    %v214 = vsub.f32 %v70, %v213
    %215 = vmatmul.f32.gmra.mxu0 %v214
    %v216 = vpop.f32.mrf.mxu0
    %v217 = vadd.f32 %v175, %v216
    %v218 = vand.u32 %v73, 4294901760
    %v219 = vsub.f32 %v73, %v218
    %220 = vmatmul.f32.gmra.mxu0 %v219
    %v221 = vpop.f32.mrf.mxu0
    %v222 = vadd.f32 %v179, %v221
    %223 = vdwg.mxu0
    %224 = vmatpush.msra.mxu0 0.0
    %225 = vmatpush.msra.mxu0 0.0
    %226 = vmatpush.msra.mxu0 0.0
    %227 = vmatpush.msra.mxu0 0.0
    %228 = vmatpush.msra.mxu0 0.0
    %229 = vmatpush.msra.mxu0 0.0
    %230 = vmatpush.msra.mxu0 0.0
    %231 = vmatpush.msra.mxu0 0.0
    %v232 = vand.u32 %v65, 4294901760
    %233 = vmatpush.msra.mxu0 %v232
    %v234 = vand.u32 %v62, 4294901760
    %235 = vmatpush.msra.mxu0 %v234
    %v236 = vand.u32 %v59, 4294901760
    %237 = vmatpush.msra.mxu0 %v236
    %v238 = vand.u32 %v56, 4294901760
    %239 = vmatpush.msra.mxu0 %v238
    %v240 = vand.u32 %v53, 4294901760
    %241 = vmatpush.msra.mxu0 %v240
    %v242 = vand.u32 %v50, 4294901760
    %243 = vmatpush.msra.mxu0 %v242
    %v244 = vand.u32 %v47, 4294901760
    %245 = vmatpush.msra.mxu0 %v244
    %v246 = vand.u32 %v44, 4294901760
    %247 = vmatpush.msra.mxu0 %v246
    %v248 = vand.u32 %v70, 4294901760
    %v249 = vsub.f32 %v70, %v248
    %v250 = vand.u32 %v249, 4294901760
    %251 = vmatmul.f32.gmra.mxu0 %v250
    %v252 = vpop.f32.mrf.mxu0
    %v253 = vadd.f32 %v217, %v252
    %v254 = vand.u32 %v73, 4294901760
    %v255 = vsub.f32 %v73, %v254
    %v256 = vand.u32 %v255, 4294901760
    %257 = vmatmul.f32.gmra.mxu0 %v256
    %v258 = vpop.f32.mrf.mxu0
    %v259 = vadd.f32 %v222, %v258
    %260 = vdwg.mxu0
    %261 = vmatpush.msra.mxu0 0.0
    %262 = vmatpush.msra.mxu0 0.0
    %263 = vmatpush.msra.mxu0 0.0
    %264 = vmatpush.msra.mxu0 0.0
    %265 = vmatpush.msra.mxu0 0.0
    %266 = vmatpush.msra.mxu0 0.0
    %267 = vmatpush.msra.mxu0 0.0
    %268 = vmatpush.msra.mxu0 0.0
    %v269 = vand.u32 %v65, 4294901760
    %v270 = vsub.f32 %v65, %v269
    %v271 = vand.u32 %v270, 4294901760
    %272 = vmatpush.msra.mxu0 %v271
    %v273 = vand.u32 %v62, 4294901760
    %v274 = vsub.f32 %v62, %v273
    %v275 = vand.u32 %v274, 4294901760
    %276 = vmatpush.msra.mxu0 %v275
    %v277 = vand.u32 %v59, 4294901760
    %v278 = vsub.f32 %v59, %v277
    %v279 = vand.u32 %v278, 4294901760
    %280 = vmatpush.msra.mxu0 %v279
    %v281 = vand.u32 %v56, 4294901760
    %v282 = vsub.f32 %v56, %v281
    %v283 = vand.u32 %v282, 4294901760
    %284 = vmatpush.msra.mxu0 %v283
    %v285 = vand.u32 %v53, 4294901760
    %v286 = vsub.f32 %v53, %v285
    %v287 = vand.u32 %v286, 4294901760
    %288 = vmatpush.msra.mxu0 %v287
    %v289 = vand.u32 %v50, 4294901760
    %v290 = vsub.f32 %v50, %v289
    %v291 = vand.u32 %v290, 4294901760
    %292 = vmatpush.msra.mxu0 %v291
    %v293 = vand.u32 %v47, 4294901760
    %v294 = vsub.f32 %v47, %v293
    %v295 = vand.u32 %v294, 4294901760
    %296 = vmatpush.msra.mxu0 %v295
    %v297 = vand.u32 %v44, 4294901760
    %v298 = vsub.f32 %v44, %v297
    %v299 = vand.u32 %v298, 4294901760
    %300 = vmatpush.msra.mxu0 %v299
    %v301 = vand.u32 %v70, 4294901760
    %302 = vmatmul.f32.gmra.mxu0 %v301
    %v303 = vpop.f32.mrf.mxu0
    %v304 = vadd.f32 %v253, %v303
    %v305 = vand.u32 %v73, 4294901760
    %306 = vmatmul.f32.gmra.mxu0 %v305
    %v307 = vpop.f32.mrf.mxu0
    %v308 = vadd.f32 %v259, %v307
    %309 = vdwg.mxu0
    %310 = vmatpush.msra.mxu0 0.0
    %311 = vmatpush.msra.mxu0 0.0
    %312 = vmatpush.msra.mxu0 0.0
    %313 = vmatpush.msra.mxu0 0.0
    %314 = vmatpush.msra.mxu0 0.0
    %315 = vmatpush.msra.mxu0 0.0
    %316 = vmatpush.msra.mxu0 0.0
    %317 = vmatpush.msra.mxu0 0.0
    %v318 = vand.u32 %v65, 4294901760
    %319 = vmatpush.msra.mxu0 %v318
    %v320 = vand.u32 %v62, 4294901760
    %321 = vmatpush.msra.mxu0 %v320
    %v322 = vand.u32 %v59, 4294901760
    %323 = vmatpush.msra.mxu0 %v322
    %v324 = vand.u32 %v56, 4294901760
    %325 = vmatpush.msra.mxu0 %v324
    %v326 = vand.u32 %v53, 4294901760
    %327 = vmatpush.msra.mxu0 %v326
    %v328 = vand.u32 %v50, 4294901760
    %329 = vmatpush.msra.mxu0 %v328
    %v330 = vand.u32 %v47, 4294901760
    %331 = vmatpush.msra.mxu0 %v330
    %v332 = vand.u32 %v44, 4294901760
    %333 = vmatpush.msra.mxu0 %v332
    %v334 = vand.u32 %v70, 4294901760
    %335 = vmatmul.f32.gmra.mxu0 %v334
    %v336 = vpop.f32.mrf.mxu0
    %v337 = vadd.f32 %v304, %v336
    %v338 = vand.u32 %v73, 4294901760
    %339 = vmatmul.f32.gmra.mxu0 %v338
    %v340 = vpop.f32.mrf.mxu0
    %v341 = vadd.f32 %v308, %v340
    %342 = vdwg.mxu0
    %343 = vmatpush.msra.mxu0 0.0
    %344 = vmatpush.msra.mxu0 0.0
    %345 = vmatpush.msra.mxu0 0.0
    %346 = vmatpush.msra.mxu0 0.0
    %347 = vmatpush.msra.mxu0 0.0
    %348 = vmatpush.msra.mxu0 0.0
    %349 = vmatpush.msra.mxu0 0.0
    %350 = vmatpush.msra.mxu0 0.0
    %v351 = vand.u32 %v66, 4294901760
    %352 = vmatpush.msra.mxu0 %v351
    %v353 = vand.u32 %v63, 4294901760
    %354 = vmatpush.msra.mxu0 %v353
    %v355 = vand.u32 %v60, 4294901760
    %356 = vmatpush.msra.mxu0 %v355
    %v357 = vand.u32 %v57, 4294901760
    %358 = vmatpush.msra.mxu0 %v357
    %v359 = vand.u32 %v54, 4294901760
    %360 = vmatpush.msra.mxu0 %v359
    %v361 = vand.u32 %v51, 4294901760
    %362 = vmatpush.msra.mxu0 %v361
    %v363 = vand.u32 %v48, 4294901760
    %364 = vmatpush.msra.mxu0 %v363
    %v365 = vand.u32 %v45, 4294901760
    %366 = vmatpush.msra.mxu0 %v365
    %v367 = vand.u32 %v70, 4294901760
    %v368 = vsub.f32 %v70, %v367
    %v369 = vand.u32 %v368, 4294901760
    %v370 = vsub.f32 %v368, %v369
    %v371 = vand.u32 %v370, 4294901760
    %372 = vmatmul.f32.gmra.mxu0 %v371
    %v373 = vpop.f32.mrf.mxu0
    %v374 = vadd.f32 0.0, %v373
    %v375 = vand.u32 %v73, 4294901760
    %v376 = vsub.f32 %v73, %v375
    %v377 = vand.u32 %v376, 4294901760
    %v378 = vsub.f32 %v376, %v377
    %v379 = vand.u32 %v378, 4294901760
    %380 = vmatmul.f32.gmra.mxu0 %v379
    %v381 = vpop.f32.mrf.mxu0
    %v382 = vadd.f32 0.0, %v381
    %383 = vdwg.mxu0
    %384 = vmatpush.msra.mxu0 0.0
    %385 = vmatpush.msra.mxu0 0.0
    %386 = vmatpush.msra.mxu0 0.0
    %387 = vmatpush.msra.mxu0 0.0
    %388 = vmatpush.msra.mxu0 0.0
    %389 = vmatpush.msra.mxu0 0.0
    %390 = vmatpush.msra.mxu0 0.0
    %391 = vmatpush.msra.mxu0 0.0
    %v392 = vand.u32 %v66, 4294901760
    %v393 = vsub.f32 %v66, %v392
    %v394 = vand.u32 %v393, 4294901760
    %v395 = vsub.f32 %v393, %v394
    %v396 = vand.u32 %v395, 4294901760
    %397 = vmatpush.msra.mxu0 %v396
    %v398 = vand.u32 %v63, 4294901760
    %v399 = vsub.f32 %v63, %v398
    %v400 = vand.u32 %v399, 4294901760
    %v401 = vsub.f32 %v399, %v400
    %v402 = vand.u32 %v401, 4294901760
    %403 = vmatpush.msra.mxu0 %v402
    %v404 = vand.u32 %v60, 4294901760
    %v405 = vsub.f32 %v60, %v404
    %v406 = vand.u32 %v405, 4294901760
    %v407 = vsub.f32 %v405, %v406
    %v408 = vand.u32 %v407, 4294901760
    %409 = vmatpush.msra.mxu0 %v408
    %v410 = vand.u32 %v57, 4294901760
    %v411 = vsub.f32 %v57, %v410
    %v412 = vand.u32 %v411, 4294901760
    %v413 = vsub.f32 %v411, %v412
    %v414 = vand.u32 %v413, 4294901760
    %415 = vmatpush.msra.mxu0 %v414
    %v416 = vand.u32 %v54, 4294901760
    %v417 = vsub.f32 %v54, %v416
    %v418 = vand.u32 %v417, 4294901760
    %v419 = vsub.f32 %v417, %v418
    %v420 = vand.u32 %v419, 4294901760
    %421 = vmatpush.msra.mxu0 %v420
    %v422 = vand.u32 %v51, 4294901760
    %v423 = vsub.f32 %v51, %v422
    %v424 = vand.u32 %v423, 4294901760
    %v425 = vsub.f32 %v423, %v424
    %v426 = vand.u32 %v425, 4294901760
    %427 = vmatpush.msra.mxu0 %v426
    %v428 = vand.u32 %v48, 4294901760
    %v429 = vsub.f32 %v48, %v428
    %v430 = vand.u32 %v429, 4294901760
    %v431 = vsub.f32 %v429, %v430
    %v432 = vand.u32 %v431, 4294901760
    %433 = vmatpush.msra.mxu0 %v432
    %v434 = vand.u32 %v45, 4294901760
    %v435 = vsub.f32 %v45, %v434
    %v436 = vand.u32 %v435, 4294901760
    %v437 = vsub.f32 %v435, %v436
    %v438 = vand.u32 %v437, 4294901760
    %439 = vmatpush.msra.mxu0 %v438
    %v440 = vand.u32 %v70, 4294901760
    %441 = vmatmul.f32.gmra.mxu0 %v440
    %v442 = vpop.f32.mrf.mxu0
    %v443 = vadd.f32 %v374, %v442
    %v444 = vand.u32 %v73, 4294901760
    %445 = vmatmul.f32.gmra.mxu0 %v444
    %v446 = vpop.f32.mrf.mxu0
    %v447 = vadd.f32 %v382, %v446
    %448 = vdwg.mxu0
    %449 = vmatpush.msra.mxu0 0.0
    %450 = vmatpush.msra.mxu0 0.0
    %451 = vmatpush.msra.mxu0 0.0
    %452 = vmatpush.msra.mxu0 0.0
    %453 = vmatpush.msra.mxu0 0.0
    %454 = vmatpush.msra.mxu0 0.0
    %455 = vmatpush.msra.mxu0 0.0
    %456 = vmatpush.msra.mxu0 0.0
    %v457 = vand.u32 %v66, 4294901760
    %v458 = vsub.f32 %v66, %v457
    %459 = vmatpush.msra.mxu0 %v458
    %v460 = vand.u32 %v63, 4294901760
    %v461 = vsub.f32 %v63, %v460
    %462 = vmatpush.msra.mxu0 %v461
    %v463 = vand.u32 %v60, 4294901760
    %v464 = vsub.f32 %v60, %v463
    %465 = vmatpush.msra.mxu0 %v464
    %v466 = vand.u32 %v57, 4294901760
    %v467 = vsub.f32 %v57, %v466
    %468 = vmatpush.msra.mxu0 %v467
    %v469 = vand.u32 %v54, 4294901760
    %v470 = vsub.f32 %v54, %v469
    %471 = vmatpush.msra.mxu0 %v470
    %v472 = vand.u32 %v51, 4294901760
    %v473 = vsub.f32 %v51, %v472
    %474 = vmatpush.msra.mxu0 %v473
    %v475 = vand.u32 %v48, 4294901760
    %v476 = vsub.f32 %v48, %v475
    %477 = vmatpush.msra.mxu0 %v476
    %v478 = vand.u32 %v45, 4294901760
    %v479 = vsub.f32 %v45, %v478
    %480 = vmatpush.msra.mxu0 %v479
    %v481 = vand.u32 %v70, 4294901760
    %v482 = vsub.f32 %v70, %v481
    %483 = vmatmul.f32.gmra.mxu0 %v482
    %v484 = vpop.f32.mrf.mxu0
    %v485 = vadd.f32 %v443, %v484
    %v486 = vand.u32 %v73, 4294901760
    %v487 = vsub.f32 %v73, %v486
    %488 = vmatmul.f32.gmra.mxu0 %v487
    %v489 = vpop.f32.mrf.mxu0
    %v490 = vadd.f32 %v447, %v489
    %491 = vdwg.mxu0
    %492 = vmatpush.msra.mxu0 0.0
    %493 = vmatpush.msra.mxu0 0.0
    %494 = vmatpush.msra.mxu0 0.0
    %495 = vmatpush.msra.mxu0 0.0
    %496 = vmatpush.msra.mxu0 0.0
    %497 = vmatpush.msra.mxu0 0.0
    %498 = vmatpush.msra.mxu0 0.0
    %499 = vmatpush.msra.mxu0 0.0
    %v500 = vand.u32 %v66, 4294901760
    %501 = vmatpush.msra.mxu0 %v500
    %v502 = vand.u32 %v63, 4294901760
    %503 = vmatpush.msra.mxu0 %v502
    %v504 = vand.u32 %v60, 4294901760
    %505 = vmatpush.msra.mxu0 %v504
    %v506 = vand.u32 %v57, 4294901760
    %507 = vmatpush.msra.mxu0 %v506
    %v508 = vand.u32 %v54, 4294901760
    %509 = vmatpush.msra.mxu0 %v508
    %v510 = vand.u32 %v51, 4294901760
    %511 = vmatpush.msra.mxu0 %v510
    %v512 = vand.u32 %v48, 4294901760
    %513 = vmatpush.msra.mxu0 %v512
    %v514 = vand.u32 %v45, 4294901760
    %515 = vmatpush.msra.mxu0 %v514
    %v516 = vand.u32 %v70, 4294901760
    %v517 = vsub.f32 %v70, %v516
    %v518 = vand.u32 %v517, 4294901760
    %519 = vmatmul.f32.gmra.mxu0 %v518
    %v520 = vpop.f32.mrf.mxu0
    %v521 = vadd.f32 %v485, %v520
    %v522 = vand.u32 %v73, 4294901760
    %v523 = vsub.f32 %v73, %v522
    %v524 = vand.u32 %v523, 4294901760
    %525 = vmatmul.f32.gmra.mxu0 %v524
    %v526 = vpop.f32.mrf.mxu0
    %v527 = vadd.f32 %v490, %v526
    %528 = vdwg.mxu0
    %529 = vmatpush.msra.mxu0 0.0
    %530 = vmatpush.msra.mxu0 0.0
    %531 = vmatpush.msra.mxu0 0.0
    %532 = vmatpush.msra.mxu0 0.0
    %533 = vmatpush.msra.mxu0 0.0
    %534 = vmatpush.msra.mxu0 0.0
    %535 = vmatpush.msra.mxu0 0.0
    %536 = vmatpush.msra.mxu0 0.0
    %v537 = vand.u32 %v66, 4294901760
    %v538 = vsub.f32 %v66, %v537
    %v539 = vand.u32 %v538, 4294901760
    %540 = vmatpush.msra.mxu0 %v539
    %v541 = vand.u32 %v63, 4294901760
    %v542 = vsub.f32 %v63, %v541
    %v543 = vand.u32 %v542, 4294901760
    %544 = vmatpush.msra.mxu0 %v543
    %v545 = vand.u32 %v60, 4294901760
    %v546 = vsub.f32 %v60, %v545
    %v547 = vand.u32 %v546, 4294901760
    %548 = vmatpush.msra.mxu0 %v547
    %v549 = vand.u32 %v57, 4294901760
    %v550 = vsub.f32 %v57, %v549
    %v551 = vand.u32 %v550, 4294901760
    %552 = vmatpush.msra.mxu0 %v551
    %v553 = vand.u32 %v54, 4294901760
    %v554 = vsub.f32 %v54, %v553
    %v555 = vand.u32 %v554, 4294901760
    %556 = vmatpush.msra.mxu0 %v555
    %v557 = vand.u32 %v51, 4294901760
    %v558 = vsub.f32 %v51, %v557
    %v559 = vand.u32 %v558, 4294901760
    %560 = vmatpush.msra.mxu0 %v559
    %v561 = vand.u32 %v48, 4294901760
    %v562 = vsub.f32 %v48, %v561
    %v563 = vand.u32 %v562, 4294901760
    %564 = vmatpush.msra.mxu0 %v563
    %v565 = vand.u32 %v45, 4294901760
    %v566 = vsub.f32 %v45, %v565
    %v567 = vand.u32 %v566, 4294901760
    %568 = vmatpush.msra.mxu0 %v567
    %v569 = vand.u32 %v70, 4294901760
    %570 = vmatmul.f32.gmra.mxu0 %v569
    %v571 = vpop.f32.mrf.mxu0
    %v572 = vadd.f32 %v521, %v571
    %v573 = vand.u32 %v73, 4294901760
    %574 = vmatmul.f32.gmra.mxu0 %v573
    %v575 = vpop.f32.mrf.mxu0
    %v576 = vadd.f32 %v527, %v575
    %577 = vdwg.mxu0
    %578 = vmatpush.msra.mxu0 0.0
    %579 = vmatpush.msra.mxu0 0.0
    %580 = vmatpush.msra.mxu0 0.0
    %581 = vmatpush.msra.mxu0 0.0
    %582 = vmatpush.msra.mxu0 0.0
    %583 = vmatpush.msra.mxu0 0.0
    %584 = vmatpush.msra.mxu0 0.0
    %585 = vmatpush.msra.mxu0 0.0
    %v586 = vand.u32 %v66, 4294901760
    %587 = vmatpush.msra.mxu0 %v586
    %v588 = vand.u32 %v63, 4294901760
    %589 = vmatpush.msra.mxu0 %v588
    %v590 = vand.u32 %v60, 4294901760
    %591 = vmatpush.msra.mxu0 %v590
    %v592 = vand.u32 %v57, 4294901760
    %593 = vmatpush.msra.mxu0 %v592
    %v594 = vand.u32 %v54, 4294901760
    %595 = vmatpush.msra.mxu0 %v594
    %v596 = vand.u32 %v51, 4294901760
    %597 = vmatpush.msra.mxu0 %v596
    %v598 = vand.u32 %v48, 4294901760
    %599 = vmatpush.msra.mxu0 %v598
    %v600 = vand.u32 %v45, 4294901760
    %601 = vmatpush.msra.mxu0 %v600
    %v602 = vand.u32 %v70, 4294901760
    %603 = vmatmul.f32.gmra.mxu0 %v602
    %v604 = vpop.f32.mrf.mxu0
    %v605 = vadd.f32 %v572, %v604
    %v606 = vand.u32 %v73, 4294901760
    %607 = vmatmul.f32.gmra.mxu0 %v606
    %v608 = vpop.f32.mrf.mxu0
    %v609 = vadd.f32 %v576, %v608
    %610 = vdwg.mxu0
    %611 = vmatpush.msra.mxu0 0.0
    %612 = vmatpush.msra.mxu0 0.0
    %613 = vmatpush.msra.mxu0 0.0
    %614 = vmatpush.msra.mxu0 0.0
    %615 = vmatpush.msra.mxu0 0.0
    %616 = vmatpush.msra.mxu0 0.0
    %617 = vmatpush.msra.mxu0 0.0
    %618 = vmatpush.msra.mxu0 0.0
    %v619 = vand.u32 %v67, 4294901760
    %620 = vmatpush.msra.mxu0 %v619
    %v621 = vand.u32 %v64, 4294901760
    %622 = vmatpush.msra.mxu0 %v621
    %v623 = vand.u32 %v61, 4294901760
    %624 = vmatpush.msra.mxu0 %v623
    %v625 = vand.u32 %v58, 4294901760
    %626 = vmatpush.msra.mxu0 %v625
    %v627 = vand.u32 %v55, 4294901760
    %628 = vmatpush.msra.mxu0 %v627
    %v629 = vand.u32 %v52, 4294901760
    %630 = vmatpush.msra.mxu0 %v629
    %v631 = vand.u32 %v49, 4294901760
    %632 = vmatpush.msra.mxu0 %v631
    %v633 = vand.u32 %v46, 4294901760
    %634 = vmatpush.msra.mxu0 %v633
    %v635 = vand.u32 %v70, 4294901760
    %v636 = vsub.f32 %v70, %v635
    %v637 = vand.u32 %v636, 4294901760
    %v638 = vsub.f32 %v636, %v637
    %v639 = vand.u32 %v638, 4294901760
    %640 = vmatmul.f32.gmra.mxu0 %v639
    %v641 = vpop.f32.mrf.mxu0
    %v642 = vadd.f32 0.0, %v641
    %v643 = vand.u32 %v73, 4294901760
    %v644 = vsub.f32 %v73, %v643
    %v645 = vand.u32 %v644, 4294901760
    %v646 = vsub.f32 %v644, %v645
    %v647 = vand.u32 %v646, 4294901760
    %648 = vmatmul.f32.gmra.mxu0 %v647
    %v649 = vpop.f32.mrf.mxu0
    %v650 = vadd.f32 0.0, %v649
    %651 = vdwg.mxu0
    %652 = vmatpush.msra.mxu0 0.0
    %653 = vmatpush.msra.mxu0 0.0
    %654 = vmatpush.msra.mxu0 0.0
    %655 = vmatpush.msra.mxu0 0.0
    %656 = vmatpush.msra.mxu0 0.0
    %657 = vmatpush.msra.mxu0 0.0
    %658 = vmatpush.msra.mxu0 0.0
    %659 = vmatpush.msra.mxu0 0.0
    %v660 = vand.u32 %v67, 4294901760
    %v661 = vsub.f32 %v67, %v660
    %v662 = vand.u32 %v661, 4294901760
    %v663 = vsub.f32 %v661, %v662
    %v664 = vand.u32 %v663, 4294901760
    %665 = vmatpush.msra.mxu0 %v664
    %v666 = vand.u32 %v64, 4294901760
    %v667 = vsub.f32 %v64, %v666
    %v668 = vand.u32 %v667, 4294901760
    %v669 = vsub.f32 %v667, %v668
    %v670 = vand.u32 %v669, 4294901760
    %671 = vmatpush.msra.mxu0 %v670
    %v672 = vand.u32 %v61, 4294901760
    %v673 = vsub.f32 %v61, %v672
    %v674 = vand.u32 %v673, 4294901760
    %v675 = vsub.f32 %v673, %v674
    %v676 = vand.u32 %v675, 4294901760
    %677 = vmatpush.msra.mxu0 %v676
    %v678 = vand.u32 %v58, 4294901760
    %v679 = vsub.f32 %v58, %v678
    %v680 = vand.u32 %v679, 4294901760
    %v681 = vsub.f32 %v679, %v680
    %v682 = vand.u32 %v681, 4294901760
    %683 = vmatpush.msra.mxu0 %v682
    %v684 = vand.u32 %v55, 4294901760
    %v685 = vsub.f32 %v55, %v684
    %v686 = vand.u32 %v685, 4294901760
    %v687 = vsub.f32 %v685, %v686
    %v688 = vand.u32 %v687, 4294901760
    %689 = vmatpush.msra.mxu0 %v688
    %v690 = vand.u32 %v52, 4294901760
    %v691 = vsub.f32 %v52, %v690
    %v692 = vand.u32 %v691, 4294901760
    %v693 = vsub.f32 %v691, %v692
    %v694 = vand.u32 %v693, 4294901760
    %695 = vmatpush.msra.mxu0 %v694
    %v696 = vand.u32 %v49, 4294901760
    %v697 = vsub.f32 %v49, %v696
    %v698 = vand.u32 %v697, 4294901760
    %v699 = vsub.f32 %v697, %v698
    %v700 = vand.u32 %v699, 4294901760
    %701 = vmatpush.msra.mxu0 %v700
    %v702 = vand.u32 %v46, 4294901760
    %v703 = vsub.f32 %v46, %v702
    %v704 = vand.u32 %v703, 4294901760
    %v705 = vsub.f32 %v703, %v704
    %v706 = vand.u32 %v705, 4294901760
    %707 = vmatpush.msra.mxu0 %v706
    %v708 = vand.u32 %v70, 4294901760
    %709 = vmatmul.f32.gmra.mxu0 %v708
    %v710 = vpop.f32.mrf.mxu0
    %v711 = vadd.f32 %v642, %v710
    %v712 = vand.u32 %v73, 4294901760
    %713 = vmatmul.f32.gmra.mxu0 %v712
    %v714 = vpop.f32.mrf.mxu0
    %v715 = vadd.f32 %v650, %v714
    %716 = vdwg.mxu0
    %717 = vmatpush.msra.mxu0 0.0
    %718 = vmatpush.msra.mxu0 0.0
    %719 = vmatpush.msra.mxu0 0.0
    %720 = vmatpush.msra.mxu0 0.0
    %721 = vmatpush.msra.mxu0 0.0
    %722 = vmatpush.msra.mxu0 0.0
    %723 = vmatpush.msra.mxu0 0.0
    %724 = vmatpush.msra.mxu0 0.0
    %v725 = vand.u32 %v67, 4294901760
    %v726 = vsub.f32 %v67, %v725
    %727 = vmatpush.msra.mxu0 %v726
    %v728 = vand.u32 %v64, 4294901760
    %v729 = vsub.f32 %v64, %v728
    %730 = vmatpush.msra.mxu0 %v729
    %v731 = vand.u32 %v61, 4294901760
    %v732 = vsub.f32 %v61, %v731
    %733 = vmatpush.msra.mxu0 %v732
    %v734 = vand.u32 %v58, 4294901760
    %v735 = vsub.f32 %v58, %v734
    %736 = vmatpush.msra.mxu0 %v735
    %v737 = vand.u32 %v55, 4294901760
    %v738 = vsub.f32 %v55, %v737
    %739 = vmatpush.msra.mxu0 %v738
    %v740 = vand.u32 %v52, 4294901760
    %v741 = vsub.f32 %v52, %v740
    %742 = vmatpush.msra.mxu0 %v741
    %v743 = vand.u32 %v49, 4294901760
    %v744 = vsub.f32 %v49, %v743
    %745 = vmatpush.msra.mxu0 %v744
    %v746 = vand.u32 %v46, 4294901760
    %v747 = vsub.f32 %v46, %v746
    %748 = vmatpush.msra.mxu0 %v747
    %v749 = vand.u32 %v70, 4294901760
    %v750 = vsub.f32 %v70, %v749
    %751 = vmatmul.f32.gmra.mxu0 %v750
    %v752 = vpop.f32.mrf.mxu0
    %v753 = vadd.f32 %v711, %v752
    %v754 = vand.u32 %v73, 4294901760
    %v755 = vsub.f32 %v73, %v754
    %756 = vmatmul.f32.gmra.mxu0 %v755
    %v757 = vpop.f32.mrf.mxu0
    %v758 = vadd.f32 %v715, %v757
    %759 = vdwg.mxu0
    %760 = vmatpush.msra.mxu0 0.0
    %761 = vmatpush.msra.mxu0 0.0
    %762 = vmatpush.msra.mxu0 0.0
    %763 = vmatpush.msra.mxu0 0.0
    %764 = vmatpush.msra.mxu0 0.0
    %765 = vmatpush.msra.mxu0 0.0
    %766 = vmatpush.msra.mxu0 0.0
    %767 = vmatpush.msra.mxu0 0.0
    %v768 = vand.u32 %v67, 4294901760
    %769 = vmatpush.msra.mxu0 %v768
    %v770 = vand.u32 %v64, 4294901760
    %771 = vmatpush.msra.mxu0 %v770
    %v772 = vand.u32 %v61, 4294901760
    %773 = vmatpush.msra.mxu0 %v772
    %v774 = vand.u32 %v58, 4294901760
    %775 = vmatpush.msra.mxu0 %v774
    %v776 = vand.u32 %v55, 4294901760
    %777 = vmatpush.msra.mxu0 %v776
    %v778 = vand.u32 %v52, 4294901760
    %779 = vmatpush.msra.mxu0 %v778
    %v780 = vand.u32 %v49, 4294901760
    %781 = vmatpush.msra.mxu0 %v780
    %v782 = vand.u32 %v46, 4294901760
    %783 = vmatpush.msra.mxu0 %v782
    %v784 = vand.u32 %v70, 4294901760
    %v785 = vsub.f32 %v70, %v784
    %v786 = vand.u32 %v785, 4294901760
    %787 = vmatmul.f32.gmra.mxu0 %v786
    %v788 = vpop.f32.mrf.mxu0
    %v789 = vadd.f32 %v753, %v788
    %v790 = vand.u32 %v73, 4294901760
    %v791 = vsub.f32 %v73, %v790
    %v792 = vand.u32 %v791, 4294901760
    %793 = vmatmul.f32.gmra.mxu0 %v792
    %v794 = vpop.f32.mrf.mxu0
    %v795 = vadd.f32 %v758, %v794
    %796 = vdwg.mxu0
    %797 = vmatpush.msra.mxu0 0.0
    %798 = vmatpush.msra.mxu0 0.0
    %799 = vmatpush.msra.mxu0 0.0
    %800 = vmatpush.msra.mxu0 0.0
    %801 = vmatpush.msra.mxu0 0.0
    %802 = vmatpush.msra.mxu0 0.0
    %803 = vmatpush.msra.mxu0 0.0
    %804 = vmatpush.msra.mxu0 0.0
    %v805 = vand.u32 %v67, 4294901760
    %v806 = vsub.f32 %v67, %v805
    %v807 = vand.u32 %v806, 4294901760
    %808 = vmatpush.msra.mxu0 %v807
    %v809 = vand.u32 %v64, 4294901760
    %v810 = vsub.f32 %v64, %v809
    %v811 = vand.u32 %v810, 4294901760
    %812 = vmatpush.msra.mxu0 %v811
    %v813 = vand.u32 %v61, 4294901760
    %v814 = vsub.f32 %v61, %v813
    %v815 = vand.u32 %v814, 4294901760
    %816 = vmatpush.msra.mxu0 %v815
    %v817 = vand.u32 %v58, 4294901760
    %v818 = vsub.f32 %v58, %v817
    %v819 = vand.u32 %v818, 4294901760
    %820 = vmatpush.msra.mxu0 %v819
    %v821 = vand.u32 %v55, 4294901760
    %v822 = vsub.f32 %v55, %v821
    %v823 = vand.u32 %v822, 4294901760
    %824 = vmatpush.msra.mxu0 %v823
    %v825 = vand.u32 %v52, 4294901760
    %v826 = vsub.f32 %v52, %v825
    %v827 = vand.u32 %v826, 4294901760
    %828 = vmatpush.msra.mxu0 %v827
    %v829 = vand.u32 %v49, 4294901760
    %v830 = vsub.f32 %v49, %v829
    %v831 = vand.u32 %v830, 4294901760
    %832 = vmatpush.msra.mxu0 %v831
    %v833 = vand.u32 %v46, 4294901760
    %v834 = vsub.f32 %v46, %v833
    %v835 = vand.u32 %v834, 4294901760
    %836 = vmatpush.msra.mxu0 %v835
    %v837 = vand.u32 %v70, 4294901760
    %838 = vmatmul.f32.gmra.mxu0 %v837
    %v839 = vpop.f32.mrf.mxu0
    %v840 = vadd.f32 %v789, %v839
    %v841 = vand.u32 %v73, 4294901760
    %842 = vmatmul.f32.gmra.mxu0 %v841
    %v843 = vpop.f32.mrf.mxu0
    %v844 = vadd.f32 %v795, %v843
    %845 = vdwg.mxu0
    %846 = vmatpush.msra.mxu0 0.0
    %847 = vmatpush.msra.mxu0 0.0
    %848 = vmatpush.msra.mxu0 0.0
    %849 = vmatpush.msra.mxu0 0.0
    %850 = vmatpush.msra.mxu0 0.0
    %851 = vmatpush.msra.mxu0 0.0
    %852 = vmatpush.msra.mxu0 0.0
    %853 = vmatpush.msra.mxu0 0.0
    %v854 = vand.u32 %v67, 4294901760
    %855 = vmatpush.msra.mxu0 %v854
    %v856 = vand.u32 %v64, 4294901760
    %857 = vmatpush.msra.mxu0 %v856
    %v858 = vand.u32 %v61, 4294901760
    %859 = vmatpush.msra.mxu0 %v858
    %v860 = vand.u32 %v58, 4294901760
    %861 = vmatpush.msra.mxu0 %v860
    %v862 = vand.u32 %v55, 4294901760
    %863 = vmatpush.msra.mxu0 %v862
    %v864 = vand.u32 %v52, 4294901760
    %865 = vmatpush.msra.mxu0 %v864
    %v866 = vand.u32 %v49, 4294901760
    %867 = vmatpush.msra.mxu0 %v866
    %v868 = vand.u32 %v46, 4294901760
    %869 = vmatpush.msra.mxu0 %v868
    %v870 = vand.u32 %v70, 4294901760
    %871 = vmatmul.f32.gmra.mxu0 %v870
    %v872 = vpop.f32.mrf.mxu0
    %v873 = vadd.f32 %v840, %v872
    %v874 = vand.u32 %v73, 4294901760
    %875 = vmatmul.f32.gmra.mxu0 %v874
    %v876 = vpop.f32.mrf.mxu0
    %v877 = vadd.f32 %v844, %v876
    %878 = vdwg.mxu0
    %v879 = vld [vmem:[#allocation2 + $0x1c8] sm:$0xff]
    %v880 = vld [vmem:[#allocation2 + $0x1e0] sm:$0xff]
    %v881 = vld [vmem:[#allocation2 + $0x1f8] sm:$0xff]
    %v882 = vld [vmem:[#allocation2 + $0x210] sm:$0xff]
    %v883 = vld [vmem:[#allocation2 + $0x228] sm:$0xff]
    %v884 = vld [vmem:[#allocation2 + $0x240] sm:$0xff]
    %v885 = vld [vmem:[#allocation2 + $0x258] sm:$0xff]
    %v886 = vld [vmem:[#allocation2 + $0x270] sm:$0xff]
    %v887 = vld [vmem:[#allocation2 + $0x288] sm:$0xff]
    %v888 = vld [vmem:[#allocation2 + $0x2a0] sm:$0xff]
    %v889 = vld [vmem:[#allocation2 + $0x2b8] sm:$0xff]
    %v890 = vld [vmem:[#allocation2 + $0x2d0] sm:$0xff]
    %v891 = vld [vmem:[#allocation2 + $0x2e8] sm:$0xff]
    %v892 = vld [vmem:[#allocation2 + $0x300] sm:$0xff]
    %v893 = vld [vmem:[#allocation2 + $0x318] sm:$0xff]
    %v894 = vld [vmem:[#allocation2 + $0x330] sm:$0xff]
    %v895 = vld [vmem:[#allocation2 + $0x198] sm:$0xff]
    %v896 = vld [vmem:[#allocation2 + $0x1b0] sm:$0xff]
    %v897 = vmul.f32 %v605, %v879
    %v898 = vmul.f32 %v609, %v880
    %v899 = vmul.f32 %v605, %v881
    %v900 = vmul.f32 %v609, %v882
    %v901 = vmul.f32 %v605, %v883
    %v902 = vmul.f32 %v609, %v884
    %v903 = vmul.f32 %v605, %v885
    %v904 = vmul.f32 %v609, %v886
    %v905 = vmul.f32 %v605, %v887
    %v906 = vmul.f32 %v609, %v888
    %v907 = vmul.f32 %v605, %v889
    %v908 = vmul.f32 %v609, %v890
    %v909 = vmul.f32 %v605, %v891
    %v910 = vmul.f32 %v609, %v892
    %v911 = vmul.f32 %v605, %v893
    %v912 = vmul.f32 %v609, %v894
    %v913 = vmul.f32 %v873, %v879
    %v914 = vmul.f32 %v877, %v880
    %v915 = vmul.f32 %v873, %v881
    %v916 = vmul.f32 %v877, %v882
    %v917 = vmul.f32 %v873, %v883
    %v918 = vmul.f32 %v877, %v884
    %v919 = vmul.f32 %v873, %v885
    %v920 = vmul.f32 %v877, %v886
    %v921 = vmul.f32 %v873, %v887
    %v922 = vmul.f32 %v877, %v888
    %v923 = vmul.f32 %v873, %v889
    %v924 = vmul.f32 %v877, %v890
    %v925 = vmul.f32 %v873, %v891
    %v926 = vmul.f32 %v877, %v892
    %v927 = vmul.f32 %v873, %v893
    %v928 = vmul.f32 %v877, %v894
    %v929 = vmul.f32 %v337, 0.35355338
    %v930 = vmul.f32 %v341, 0.35355338
    %v932 = vsel %vm68, %v929, 0
    %v935 = vsel %vm68, %v930, 0
    %v938 = vsel %vm68, %v897, 0
    %v941 = vsel %vm68, %v898, 0
    %v944 = vsel %vm68, %v899, 0
    %v947 = vsel %vm68, %v900, 0
    %v950 = vsel %vm68, %v901, 0
    %v953 = vsel %vm68, %v902, 0
    %v956 = vsel %vm68, %v903, 0
    %v959 = vsel %vm68, %v904, 0
    %v962 = vsel %vm68, %v905, 0
    %v965 = vsel %vm68, %v906, 0
    %v968 = vsel %vm68, %v907, 0
    %v971 = vsel %vm68, %v908, 0
    %v974 = vsel %vm68, %v909, 0
    %v977 = vsel %vm68, %v910, 0
    %v980 = vsel %vm68, %v911, 0
    %v983 = vsel %vm68, %v912, 0
    %v985 = vand.u32 %v983, 4294901760
    %986 = vmatpush.xpose.msra.mxu0 %v985
    %v987 = vand.u32 %v980, 4294901760
    %988 = vmatpush.xpose.msra.mxu0 %v987
    %v989 = vand.u32 %v977, 4294901760
    %990 = vmatpush.xpose.msra.mxu0 %v989
    %v991 = vand.u32 %v974, 4294901760
    %992 = vmatpush.xpose.msra.mxu0 %v991
    %v993 = vand.u32 %v971, 4294901760
    %994 = vmatpush.xpose.msra.mxu0 %v993
    %v995 = vand.u32 %v968, 4294901760
    %996 = vmatpush.xpose.msra.mxu0 %v995
    %v997 = vand.u32 %v965, 4294901760
    %998 = vmatpush.xpose.msra.mxu0 %v997
    %v999 = vand.u32 %v962, 4294901760
    %1000 = vmatpush.xpose.msra.mxu0 %v999
    %v1001 = vand.u32 %v959, 4294901760
    %1002 = vmatpush.xpose.msra.mxu0 %v1001
    %v1003 = vand.u32 %v956, 4294901760
    %1004 = vmatpush.xpose.msra.mxu0 %v1003
    %v1005 = vand.u32 %v953, 4294901760
    %1006 = vmatpush.xpose.msra.mxu0 %v1005
    %v1007 = vand.u32 %v950, 4294901760
    %1008 = vmatpush.xpose.msra.mxu0 %v1007
    %v1009 = vand.u32 %v947, 4294901760
    %1010 = vmatpush.xpose.msra.mxu0 %v1009
    %v1011 = vand.u32 %v944, 4294901760
    %1012 = vmatpush.xpose.msra.mxu0 %v1011
    %v1013 = vand.u32 %v941, 4294901760
    %1014 = vmatpush.xpose.msra.mxu0 %v1013
    %v1015 = vand.u32 %v938, 4294901760
    %1016 = vmatpush.xpose.msra.mxu0 %v1015
    %v1017 = vand.u32 %v932, 4294901760
    %v1018 = vsub.f32 %v932, %v1017
    %v1019 = vand.u32 %v1018, 4294901760
    %v1020 = vsub.f32 %v1018, %v1019
    %v1021 = vand.u32 %v1020, 4294901760
    %1022 = vmatmul.f32.gmra.mxu0 %v1021
    %v1023 = vpop.f32.mrf.mxu0
    %v1024 = vadd.f32 0.0, %v1023
    %v1025 = vand.u32 %v935, 4294901760
    %v1026 = vsub.f32 %v935, %v1025
    %v1027 = vand.u32 %v1026, 4294901760
    %v1028 = vsub.f32 %v1026, %v1027
    %v1029 = vand.u32 %v1028, 4294901760
    %1030 = vmatmul.f32.gmra.mxu0 %v1029
    %v1031 = vpop.f32.mrf.mxu0
    %v1032 = vadd.f32 0.0, %v1031
    %1033 = vdwg.mxu0
    %v1034 = vand.u32 %v983, 4294901760
    %v1035 = vsub.f32 %v983, %v1034
    %v1036 = vand.u32 %v1035, 4294901760
    %v1037 = vsub.f32 %v1035, %v1036
    %v1038 = vand.u32 %v1037, 4294901760
    %1039 = vmatpush.xpose.msra.mxu0 %v1038
    %v1040 = vand.u32 %v980, 4294901760
    %v1041 = vsub.f32 %v980, %v1040
    %v1042 = vand.u32 %v1041, 4294901760
    %v1043 = vsub.f32 %v1041, %v1042
    %v1044 = vand.u32 %v1043, 4294901760
    %1045 = vmatpush.xpose.msra.mxu0 %v1044
    %v1046 = vand.u32 %v977, 4294901760
    %v1047 = vsub.f32 %v977, %v1046
    %v1048 = vand.u32 %v1047, 4294901760
    %v1049 = vsub.f32 %v1047, %v1048
    %v1050 = vand.u32 %v1049, 4294901760
    %1051 = vmatpush.xpose.msra.mxu0 %v1050
    %v1052 = vand.u32 %v974, 4294901760
    %v1053 = vsub.f32 %v974, %v1052
    %v1054 = vand.u32 %v1053, 4294901760
    %v1055 = vsub.f32 %v1053, %v1054
    %v1056 = vand.u32 %v1055, 4294901760
    %1057 = vmatpush.xpose.msra.mxu0 %v1056
    %v1058 = vand.u32 %v971, 4294901760
    %v1059 = vsub.f32 %v971, %v1058
    %v1060 = vand.u32 %v1059, 4294901760
    %v1061 = vsub.f32 %v1059, %v1060
    %v1062 = vand.u32 %v1061, 4294901760
    %1063 = vmatpush.xpose.msra.mxu0 %v1062
    %v1064 = vand.u32 %v968, 4294901760
    %v1065 = vsub.f32 %v968, %v1064
    %v1066 = vand.u32 %v1065, 4294901760
    %v1067 = vsub.f32 %v1065, %v1066
    %v1068 = vand.u32 %v1067, 4294901760
    %1069 = vmatpush.xpose.msra.mxu0 %v1068
    %v1070 = vand.u32 %v965, 4294901760
    %v1071 = vsub.f32 %v965, %v1070
    %v1072 = vand.u32 %v1071, 4294901760
    %v1073 = vsub.f32 %v1071, %v1072
    %v1074 = vand.u32 %v1073, 4294901760
    %1075 = vmatpush.xpose.msra.mxu0 %v1074
    %v1076 = vand.u32 %v962, 4294901760
    %v1077 = vsub.f32 %v962, %v1076
    %v1078 = vand.u32 %v1077, 4294901760
    %v1079 = vsub.f32 %v1077, %v1078
    %v1080 = vand.u32 %v1079, 4294901760
    %1081 = vmatpush.xpose.msra.mxu0 %v1080
    %v1082 = vand.u32 %v959, 4294901760
    %v1083 = vsub.f32 %v959, %v1082
    %v1084 = vand.u32 %v1083, 4294901760
    %v1085 = vsub.f32 %v1083, %v1084
    %v1086 = vand.u32 %v1085, 4294901760
    %1087 = vmatpush.xpose.msra.mxu0 %v1086
    %v1088 = vand.u32 %v956, 4294901760
    %v1089 = vsub.f32 %v956, %v1088
    %v1090 = vand.u32 %v1089, 4294901760
    %v1091 = vsub.f32 %v1089, %v1090
    %v1092 = vand.u32 %v1091, 4294901760
    %1093 = vmatpush.xpose.msra.mxu0 %v1092
    %v1094 = vand.u32 %v953, 4294901760
    %v1095 = vsub.f32 %v953, %v1094
    %v1096 = vand.u32 %v1095, 4294901760
    %v1097 = vsub.f32 %v1095, %v1096
    %v1098 = vand.u32 %v1097, 4294901760
    %1099 = vmatpush.xpose.msra.mxu0 %v1098
    %v1100 = vand.u32 %v950, 4294901760
    %v1101 = vsub.f32 %v950, %v1100
    %v1102 = vand.u32 %v1101, 4294901760
    %v1103 = vsub.f32 %v1101, %v1102
    %v1104 = vand.u32 %v1103, 4294901760
    %1105 = vmatpush.xpose.msra.mxu0 %v1104
    %v1106 = vand.u32 %v947, 4294901760
    %v1107 = vsub.f32 %v947, %v1106
    %v1108 = vand.u32 %v1107, 4294901760
    %v1109 = vsub.f32 %v1107, %v1108
    %v1110 = vand.u32 %v1109, 4294901760
    %1111 = vmatpush.xpose.msra.mxu0 %v1110
    %v1112 = vand.u32 %v944, 4294901760
    %v1113 = vsub.f32 %v944, %v1112
    %v1114 = vand.u32 %v1113, 4294901760
    %v1115 = vsub.f32 %v1113, %v1114
    %v1116 = vand.u32 %v1115, 4294901760
    %1117 = vmatpush.xpose.msra.mxu0 %v1116
    %v1118 = vand.u32 %v941, 4294901760
    %v1119 = vsub.f32 %v941, %v1118
    %v1120 = vand.u32 %v1119, 4294901760
    %v1121 = vsub.f32 %v1119, %v1120
    %v1122 = vand.u32 %v1121, 4294901760
    %1123 = vmatpush.xpose.msra.mxu0 %v1122
    %v1124 = vand.u32 %v938, 4294901760
    %v1125 = vsub.f32 %v938, %v1124
    %v1126 = vand.u32 %v1125, 4294901760
    %v1127 = vsub.f32 %v1125, %v1126
    %v1128 = vand.u32 %v1127, 4294901760
    %1129 = vmatpush.xpose.msra.mxu0 %v1128
    %v1130 = vand.u32 %v932, 4294901760
    %1131 = vmatmul.f32.gmra.mxu0 %v1130
    %v1132 = vpop.f32.mrf.mxu0
    %v1133 = vadd.f32 %v1024, %v1132
    %v1134 = vand.u32 %v935, 4294901760
    %1135 = vmatmul.f32.gmra.mxu0 %v1134
    %v1136 = vpop.f32.mrf.mxu0
    %v1137 = vadd.f32 %v1032, %v1136
    %1138 = vdwg.mxu0
    %v1139 = vand.u32 %v983, 4294901760
    %v1140 = vsub.f32 %v983, %v1139
    %1141 = vmatpush.xpose.msra.mxu0 %v1140
    %v1142 = vand.u32 %v980, 4294901760
    %v1143 = vsub.f32 %v980, %v1142
    %1144 = vmatpush.xpose.msra.mxu0 %v1143
    %v1145 = vand.u32 %v977, 4294901760
    %v1146 = vsub.f32 %v977, %v1145
    %1147 = vmatpush.xpose.msra.mxu0 %v1146
    %v1148 = vand.u32 %v974, 4294901760
    %v1149 = vsub.f32 %v974, %v1148
    %1150 = vmatpush.xpose.msra.mxu0 %v1149
    %v1151 = vand.u32 %v971, 4294901760
    %v1152 = vsub.f32 %v971, %v1151
    %1153 = vmatpush.xpose.msra.mxu0 %v1152
    %v1154 = vand.u32 %v968, 4294901760
    %v1155 = vsub.f32 %v968, %v1154
    %1156 = vmatpush.xpose.msra.mxu0 %v1155
    %v1157 = vand.u32 %v965, 4294901760
    %v1158 = vsub.f32 %v965, %v1157
    %1159 = vmatpush.xpose.msra.mxu0 %v1158
    %v1160 = vand.u32 %v962, 4294901760
    %v1161 = vsub.f32 %v962, %v1160
    %1162 = vmatpush.xpose.msra.mxu0 %v1161
    %v1163 = vand.u32 %v959, 4294901760
    %v1164 = vsub.f32 %v959, %v1163
    %1165 = vmatpush.xpose.msra.mxu0 %v1164
    %v1166 = vand.u32 %v956, 4294901760
    %v1167 = vsub.f32 %v956, %v1166
    %1168 = vmatpush.xpose.msra.mxu0 %v1167
    %v1169 = vand.u32 %v953, 4294901760
    %v1170 = vsub.f32 %v953, %v1169
    %1171 = vmatpush.xpose.msra.mxu0 %v1170
    %v1172 = vand.u32 %v950, 4294901760
    %v1173 = vsub.f32 %v950, %v1172
    %1174 = vmatpush.xpose.msra.mxu0 %v1173
    %v1175 = vand.u32 %v947, 4294901760
    %v1176 = vsub.f32 %v947, %v1175
    %1177 = vmatpush.xpose.msra.mxu0 %v1176
    %v1178 = vand.u32 %v944, 4294901760
    %v1179 = vsub.f32 %v944, %v1178
    %1180 = vmatpush.xpose.msra.mxu0 %v1179
    %v1181 = vand.u32 %v941, 4294901760
    %v1182 = vsub.f32 %v941, %v1181
    %1183 = vmatpush.xpose.msra.mxu0 %v1182
    %v1184 = vand.u32 %v938, 4294901760
    %v1185 = vsub.f32 %v938, %v1184
    %1186 = vmatpush.xpose.msra.mxu0 %v1185
    %v1187 = vand.u32 %v932, 4294901760
    %v1188 = vsub.f32 %v932, %v1187
    %1189 = vmatmul.f32.gmra.mxu0 %v1188
    %v1190 = vpop.f32.mrf.mxu0
    %v1191 = vadd.f32 %v1133, %v1190
    %v1192 = vand.u32 %v935, 4294901760
    %v1193 = vsub.f32 %v935, %v1192
    %1194 = vmatmul.f32.gmra.mxu0 %v1193
    %v1195 = vpop.f32.mrf.mxu0
    %v1196 = vadd.f32 %v1137, %v1195
    %1197 = vdwg.mxu0
    %v1198 = vand.u32 %v983, 4294901760
    %1199 = vmatpush.xpose.msra.mxu0 %v1198
    %v1200 = vand.u32 %v980, 4294901760
    %1201 = vmatpush.xpose.msra.mxu0 %v1200
    %v1202 = vand.u32 %v977, 4294901760
    %1203 = vmatpush.xpose.msra.mxu0 %v1202
    %v1204 = vand.u32 %v974, 4294901760
    %1205 = vmatpush.xpose.msra.mxu0 %v1204
    %v1206 = vand.u32 %v971, 4294901760
    %1207 = vmatpush.xpose.msra.mxu0 %v1206
    %v1208 = vand.u32 %v968, 4294901760
    %1209 = vmatpush.xpose.msra.mxu0 %v1208
    %v1210 = vand.u32 %v965, 4294901760
    %1211 = vmatpush.xpose.msra.mxu0 %v1210
    %v1212 = vand.u32 %v962, 4294901760
    %1213 = vmatpush.xpose.msra.mxu0 %v1212
    %v1214 = vand.u32 %v959, 4294901760
    %1215 = vmatpush.xpose.msra.mxu0 %v1214
    %v1216 = vand.u32 %v956, 4294901760
    %1217 = vmatpush.xpose.msra.mxu0 %v1216
    %v1218 = vand.u32 %v953, 4294901760
    %1219 = vmatpush.xpose.msra.mxu0 %v1218
    %v1220 = vand.u32 %v950, 4294901760
    %1221 = vmatpush.xpose.msra.mxu0 %v1220
    %v1222 = vand.u32 %v947, 4294901760
    %1223 = vmatpush.xpose.msra.mxu0 %v1222
    %v1224 = vand.u32 %v944, 4294901760
    %1225 = vmatpush.xpose.msra.mxu0 %v1224
    %v1226 = vand.u32 %v941, 4294901760
    %1227 = vmatpush.xpose.msra.mxu0 %v1226
    %v1228 = vand.u32 %v938, 4294901760
    %1229 = vmatpush.xpose.msra.mxu0 %v1228
    %v1230 = vand.u32 %v932, 4294901760
    %v1231 = vsub.f32 %v932, %v1230
    %v1232 = vand.u32 %v1231, 4294901760
    %1233 = vmatmul.f32.gmra.mxu0 %v1232
    %v1234 = vpop.f32.mrf.mxu0
    %v1235 = vadd.f32 %v1191, %v1234
    %v1236 = vand.u32 %v935, 4294901760
    %v1237 = vsub.f32 %v935, %v1236
    %v1238 = vand.u32 %v1237, 4294901760
    %1239 = vmatmul.f32.gmra.mxu0 %v1238
    %v1240 = vpop.f32.mrf.mxu0
    %v1241 = vadd.f32 %v1196, %v1240
    %1242 = vdwg.mxu0
    %v1243 = vand.u32 %v983, 4294901760
    %v1244 = vsub.f32 %v983, %v1243
    %v1245 = vand.u32 %v1244, 4294901760
    %1246 = vmatpush.xpose.msra.mxu0 %v1245
    %v1247 = vand.u32 %v980, 4294901760
    %v1248 = vsub.f32 %v980, %v1247
    %v1249 = vand.u32 %v1248, 4294901760
    %1250 = vmatpush.xpose.msra.mxu0 %v1249
    %v1251 = vand.u32 %v977, 4294901760
    %v1252 = vsub.f32 %v977, %v1251
    %v1253 = vand.u32 %v1252, 4294901760
    %1254 = vmatpush.xpose.msra.mxu0 %v1253
    %v1255 = vand.u32 %v974, 4294901760
    %v1256 = vsub.f32 %v974, %v1255
    %v1257 = vand.u32 %v1256, 4294901760
    %1258 = vmatpush.xpose.msra.mxu0 %v1257
    %v1259 = vand.u32 %v971, 4294901760
    %v1260 = vsub.f32 %v971, %v1259
    %v1261 = vand.u32 %v1260, 4294901760
    %1262 = vmatpush.xpose.msra.mxu0 %v1261
    %v1263 = vand.u32 %v968, 4294901760
    %v1264 = vsub.f32 %v968, %v1263
    %v1265 = vand.u32 %v1264, 4294901760
    %1266 = vmatpush.xpose.msra.mxu0 %v1265
    %v1267 = vand.u32 %v965, 4294901760
    %v1268 = vsub.f32 %v965, %v1267
    %v1269 = vand.u32 %v1268, 4294901760
    %1270 = vmatpush.xpose.msra.mxu0 %v1269
    %v1271 = vand.u32 %v962, 4294901760
    %v1272 = vsub.f32 %v962, %v1271
    %v1273 = vand.u32 %v1272, 4294901760
    %1274 = vmatpush.xpose.msra.mxu0 %v1273
    %v1275 = vand.u32 %v959, 4294901760
    %v1276 = vsub.f32 %v959, %v1275
    %v1277 = vand.u32 %v1276, 4294901760
    %1278 = vmatpush.xpose.msra.mxu0 %v1277
    %v1279 = vand.u32 %v956, 4294901760
    %v1280 = vsub.f32 %v956, %v1279
    %v1281 = vand.u32 %v1280, 4294901760
    %1282 = vmatpush.xpose.msra.mxu0 %v1281
    %v1283 = vand.u32 %v953, 4294901760
    %v1284 = vsub.f32 %v953, %v1283
    %v1285 = vand.u32 %v1284, 4294901760
    %1286 = vmatpush.xpose.msra.mxu0 %v1285
    %v1287 = vand.u32 %v950, 4294901760
    %v1288 = vsub.f32 %v950, %v1287
    %v1289 = vand.u32 %v1288, 4294901760
    %1290 = vmatpush.xpose.msra.mxu0 %v1289
    %v1291 = vand.u32 %v947, 4294901760
    %v1292 = vsub.f32 %v947, %v1291
    %v1293 = vand.u32 %v1292, 4294901760
    %1294 = vmatpush.xpose.msra.mxu0 %v1293
    %v1295 = vand.u32 %v944, 4294901760
    %v1296 = vsub.f32 %v944, %v1295
    %v1297 = vand.u32 %v1296, 4294901760
    %1298 = vmatpush.xpose.msra.mxu0 %v1297
    %v1299 = vand.u32 %v941, 4294901760
    %v1300 = vsub.f32 %v941, %v1299
    %v1301 = vand.u32 %v1300, 4294901760
    %1302 = vmatpush.xpose.msra.mxu0 %v1301
    %v1303 = vand.u32 %v938, 4294901760
    %v1304 = vsub.f32 %v938, %v1303
    %v1305 = vand.u32 %v1304, 4294901760
    %1306 = vmatpush.xpose.msra.mxu0 %v1305
    %v1307 = vand.u32 %v932, 4294901760
    %1308 = vmatmul.f32.gmra.mxu0 %v1307
    %v1309 = vpop.f32.mrf.mxu0
    %v1310 = vadd.f32 %v1235, %v1309
    %v1311 = vand.u32 %v935, 4294901760
    %1312 = vmatmul.f32.gmra.mxu0 %v1311
    %v1313 = vpop.f32.mrf.mxu0
    %v1314 = vadd.f32 %v1241, %v1313
    %1315 = vdwg.mxu0
    %v1316 = vand.u32 %v983, 4294901760
    %1317 = vmatpush.xpose.msra.mxu0 %v1316
    %v1318 = vand.u32 %v980, 4294901760
    %1319 = vmatpush.xpose.msra.mxu0 %v1318
    %v1320 = vand.u32 %v977, 4294901760
    %1321 = vmatpush.xpose.msra.mxu0 %v1320
    %v1322 = vand.u32 %v974, 4294901760
    %1323 = vmatpush.xpose.msra.mxu0 %v1322
    %v1324 = vand.u32 %v971, 4294901760
    %1325 = vmatpush.xpose.msra.mxu0 %v1324
    %v1326 = vand.u32 %v968, 4294901760
    %1327 = vmatpush.xpose.msra.mxu0 %v1326
    %v1328 = vand.u32 %v965, 4294901760
    %1329 = vmatpush.xpose.msra.mxu0 %v1328
    %v1330 = vand.u32 %v962, 4294901760
    %1331 = vmatpush.xpose.msra.mxu0 %v1330
    %v1332 = vand.u32 %v959, 4294901760
    %1333 = vmatpush.xpose.msra.mxu0 %v1332
    %v1334 = vand.u32 %v956, 4294901760
    %1335 = vmatpush.xpose.msra.mxu0 %v1334
    %v1336 = vand.u32 %v953, 4294901760
    %1337 = vmatpush.xpose.msra.mxu0 %v1336
    %v1338 = vand.u32 %v950, 4294901760
    %1339 = vmatpush.xpose.msra.mxu0 %v1338
    %v1340 = vand.u32 %v947, 4294901760
    %1341 = vmatpush.xpose.msra.mxu0 %v1340
    %v1342 = vand.u32 %v944, 4294901760
    %1343 = vmatpush.xpose.msra.mxu0 %v1342
    %v1344 = vand.u32 %v941, 4294901760
    %1345 = vmatpush.xpose.msra.mxu0 %v1344
    %v1346 = vand.u32 %v938, 4294901760
    %1347 = vmatpush.xpose.msra.mxu0 %v1346
    %v1348 = vand.u32 %v932, 4294901760
    %1349 = vmatmul.f32.gmra.mxu0 %v1348
    %v1350 = vpop.f32.mrf.mxu0
    %v1351 = vadd.f32 %v1310, %v1350
    %v1352 = vand.u32 %v935, 4294901760
    %1353 = vmatmul.f32.gmra.mxu0 %v1352
    %v1354 = vpop.f32.mrf.mxu0
    %v1355 = vadd.f32 %v1314, %v1354
    %1356 = vdwg.mxu0
    %1357 = vmax.xlane.f32.xlu0 %v1351
    %v1358 = vpop.xlane.xlu0 %1357
    %1359 = vmax.xlane.f32.xlu0 %v1355
    %v1360 = vpop.xlane.xlu0 %1359
    %v1361 = vsub.f32 %v1351, %v1358
    %v1362 = vsub.f32 %v1355, %v1360
    %v1363 = vmul.f32 %v1361, 1.442695
    %v1364 = vpow.pop %v1363
    %v1365 = vmul.f32 %v1362, 1.442695
    %v1366 = vpow.pop %v1365
    %v1367 = vmul.f32 %v1364, %v895
    %v1368 = vmul.f32 %v1366, %v896
    %v1369 = vand.u32 %v928, 4294901760
    %1370 = vmatpush.msra.mxu0 %v1369
    %v1371 = vand.u32 %v927, 4294901760
    %1372 = vmatpush.msra.mxu0 %v1371
    %v1373 = vand.u32 %v926, 4294901760
    %1374 = vmatpush.msra.mxu0 %v1373
    %v1375 = vand.u32 %v925, 4294901760
    %1376 = vmatpush.msra.mxu0 %v1375
    %v1377 = vand.u32 %v924, 4294901760
    %1378 = vmatpush.msra.mxu0 %v1377
    %v1379 = vand.u32 %v923, 4294901760
    %1380 = vmatpush.msra.mxu0 %v1379
    %v1381 = vand.u32 %v922, 4294901760
    %1382 = vmatpush.msra.mxu0 %v1381
    %v1383 = vand.u32 %v921, 4294901760
    %1384 = vmatpush.msra.mxu0 %v1383
    %v1385 = vand.u32 %v920, 4294901760
    %1386 = vmatpush.msra.mxu0 %v1385
    %v1387 = vand.u32 %v919, 4294901760
    %1388 = vmatpush.msra.mxu0 %v1387
    %v1389 = vand.u32 %v918, 4294901760
    %1390 = vmatpush.msra.mxu0 %v1389
    %v1391 = vand.u32 %v917, 4294901760
    %1392 = vmatpush.msra.mxu0 %v1391
    %v1393 = vand.u32 %v916, 4294901760
    %1394 = vmatpush.msra.mxu0 %v1393
    %v1395 = vand.u32 %v915, 4294901760
    %1396 = vmatpush.msra.mxu0 %v1395
    %v1397 = vand.u32 %v914, 4294901760
    %1398 = vmatpush.msra.mxu0 %v1397
    %v1399 = vand.u32 %v913, 4294901760
    %1400 = vmatpush.msra.mxu0 %v1399
    %v1401 = vand.u32 %v1367, 4294901760
    %v1402 = vsub.f32 %v1367, %v1401
    %v1403 = vand.u32 %v1402, 4294901760
    %v1404 = vsub.f32 %v1402, %v1403
    %v1405 = vand.u32 %v1404, 4294901760
    %1406 = vmatmul.f32.gmra.mxu0 %v1405
    %v1407 = vpop.f32.mrf.mxu0
    %v1408 = vadd.f32 0.0, %v1407
    %v1409 = vand.u32 %v1368, 4294901760
    %v1410 = vsub.f32 %v1368, %v1409
    %v1411 = vand.u32 %v1410, 4294901760
    %v1412 = vsub.f32 %v1410, %v1411
    %v1413 = vand.u32 %v1412, 4294901760
    %1414 = vmatmul.f32.gmra.mxu0 %v1413
    %v1415 = vpop.f32.mrf.mxu0
    %v1416 = vadd.f32 0.0, %v1415
    %1417 = vdwg.mxu0
    %v1418 = vand.u32 %v928, 4294901760
    %v1419 = vsub.f32 %v928, %v1418
    %v1420 = vand.u32 %v1419, 4294901760
    %v1421 = vsub.f32 %v1419, %v1420
    %v1422 = vand.u32 %v1421, 4294901760
    %1423 = vmatpush.msra.mxu0 %v1422
    %v1424 = vand.u32 %v927, 4294901760
    %v1425 = vsub.f32 %v927, %v1424
    %v1426 = vand.u32 %v1425, 4294901760
    %v1427 = vsub.f32 %v1425, %v1426
    %v1428 = vand.u32 %v1427, 4294901760
    %1429 = vmatpush.msra.mxu0 %v1428
    %v1430 = vand.u32 %v926, 4294901760
    %v1431 = vsub.f32 %v926, %v1430
    %v1432 = vand.u32 %v1431, 4294901760
    %v1433 = vsub.f32 %v1431, %v1432
    %v1434 = vand.u32 %v1433, 4294901760
    %1435 = vmatpush.msra.mxu0 %v1434
    %v1436 = vand.u32 %v925, 4294901760
    %v1437 = vsub.f32 %v925, %v1436
    %v1438 = vand.u32 %v1437, 4294901760
    %v1439 = vsub.f32 %v1437, %v1438
    %v1440 = vand.u32 %v1439, 4294901760
    %1441 = vmatpush.msra.mxu0 %v1440
    %v1442 = vand.u32 %v924, 4294901760
    %v1443 = vsub.f32 %v924, %v1442
    %v1444 = vand.u32 %v1443, 4294901760
    %v1445 = vsub.f32 %v1443, %v1444
    %v1446 = vand.u32 %v1445, 4294901760
    %1447 = vmatpush.msra.mxu0 %v1446
    %v1448 = vand.u32 %v923, 4294901760
    %v1449 = vsub.f32 %v923, %v1448
    %v1450 = vand.u32 %v1449, 4294901760
    %v1451 = vsub.f32 %v1449, %v1450
    %v1452 = vand.u32 %v1451, 4294901760
    %1453 = vmatpush.msra.mxu0 %v1452
    %v1454 = vand.u32 %v922, 4294901760
    %v1455 = vsub.f32 %v922, %v1454
    %v1456 = vand.u32 %v1455, 4294901760
    %v1457 = vsub.f32 %v1455, %v1456
    %v1458 = vand.u32 %v1457, 4294901760
    %1459 = vmatpush.msra.mxu0 %v1458
    %v1460 = vand.u32 %v921, 4294901760
    %v1461 = vsub.f32 %v921, %v1460
    %v1462 = vand.u32 %v1461, 4294901760
    %v1463 = vsub.f32 %v1461, %v1462
    %v1464 = vand.u32 %v1463, 4294901760
    %1465 = vmatpush.msra.mxu0 %v1464
    %v1466 = vand.u32 %v920, 4294901760
    %v1467 = vsub.f32 %v920, %v1466
    %v1468 = vand.u32 %v1467, 4294901760
    %v1469 = vsub.f32 %v1467, %v1468
    %v1470 = vand.u32 %v1469, 4294901760
    %1471 = vmatpush.msra.mxu0 %v1470
    %v1472 = vand.u32 %v919, 4294901760
    %v1473 = vsub.f32 %v919, %v1472
    %v1474 = vand.u32 %v1473, 4294901760
    %v1475 = vsub.f32 %v1473, %v1474
    %v1476 = vand.u32 %v1475, 4294901760
    %1477 = vmatpush.msra.mxu0 %v1476
    %v1478 = vand.u32 %v918, 4294901760
    %v1479 = vsub.f32 %v918, %v1478
    %v1480 = vand.u32 %v1479, 4294901760
    %v1481 = vsub.f32 %v1479, %v1480
    %v1482 = vand.u32 %v1481, 4294901760
    %1483 = vmatpush.msra.mxu0 %v1482
    %v1484 = vand.u32 %v917, 4294901760
    %v1485 = vsub.f32 %v917, %v1484
    %v1486 = vand.u32 %v1485, 4294901760
    %v1487 = vsub.f32 %v1485, %v1486
    %v1488 = vand.u32 %v1487, 4294901760
    %1489 = vmatpush.msra.mxu0 %v1488
    %v1490 = vand.u32 %v916, 4294901760
    %v1491 = vsub.f32 %v916, %v1490
    %v1492 = vand.u32 %v1491, 4294901760
    %v1493 = vsub.f32 %v1491, %v1492
    %v1494 = vand.u32 %v1493, 4294901760
    %1495 = vmatpush.msra.mxu0 %v1494
    %v1496 = vand.u32 %v915, 4294901760
    %v1497 = vsub.f32 %v915, %v1496
    %v1498 = vand.u32 %v1497, 4294901760
    %v1499 = vsub.f32 %v1497, %v1498
    %v1500 = vand.u32 %v1499, 4294901760
    %1501 = vmatpush.msra.mxu0 %v1500
    %v1502 = vand.u32 %v914, 4294901760
    %v1503 = vsub.f32 %v914, %v1502
    %v1504 = vand.u32 %v1503, 4294901760
    %v1505 = vsub.f32 %v1503, %v1504
    %v1506 = vand.u32 %v1505, 4294901760
    %1507 = vmatpush.msra.mxu0 %v1506
    %v1508 = vand.u32 %v913, 4294901760
    %v1509 = vsub.f32 %v913, %v1508
    %v1510 = vand.u32 %v1509, 4294901760
    %v1511 = vsub.f32 %v1509, %v1510
    %v1512 = vand.u32 %v1511, 4294901760
    %1513 = vmatpush.msra.mxu0 %v1512
    %v1514 = vand.u32 %v1367, 4294901760
    %1515 = vmatmul.f32.gmra.mxu0 %v1514
    %v1516 = vpop.f32.mrf.mxu0
    %v1517 = vadd.f32 %v1408, %v1516
    %v1518 = vand.u32 %v1368, 4294901760
    %1519 = vmatmul.f32.gmra.mxu0 %v1518
    %v1520 = vpop.f32.mrf.mxu0
    %v1521 = vadd.f32 %v1416, %v1520
    %1522 = vdwg.mxu0
    %v1523 = vand.u32 %v928, 4294901760
    %v1524 = vsub.f32 %v928, %v1523
    %1525 = vmatpush.msra.mxu0 %v1524
    %v1526 = vand.u32 %v927, 4294901760
    %v1527 = vsub.f32 %v927, %v1526
    %1528 = vmatpush.msra.mxu0 %v1527
    %v1529 = vand.u32 %v926, 4294901760
    %v1530 = vsub.f32 %v926, %v1529
    %1531 = vmatpush.msra.mxu0 %v1530
    %v1532 = vand.u32 %v925, 4294901760
    %v1533 = vsub.f32 %v925, %v1532
    %1534 = vmatpush.msra.mxu0 %v1533
    %v1535 = vand.u32 %v924, 4294901760
    %v1536 = vsub.f32 %v924, %v1535
    %1537 = vmatpush.msra.mxu0 %v1536
    %v1538 = vand.u32 %v923, 4294901760
    %v1539 = vsub.f32 %v923, %v1538
    %1540 = vmatpush.msra.mxu0 %v1539
    %v1541 = vand.u32 %v922, 4294901760
    %v1542 = vsub.f32 %v922, %v1541
    %1543 = vmatpush.msra.mxu0 %v1542
    %v1544 = vand.u32 %v921, 4294901760
    %v1545 = vsub.f32 %v921, %v1544
    %1546 = vmatpush.msra.mxu0 %v1545
    %v1547 = vand.u32 %v920, 4294901760
    %v1548 = vsub.f32 %v920, %v1547
    %1549 = vmatpush.msra.mxu0 %v1548
    %v1550 = vand.u32 %v919, 4294901760
    %v1551 = vsub.f32 %v919, %v1550
    %1552 = vmatpush.msra.mxu0 %v1551
    %v1553 = vand.u32 %v918, 4294901760
    %v1554 = vsub.f32 %v918, %v1553
    %1555 = vmatpush.msra.mxu0 %v1554
    %v1556 = vand.u32 %v917, 4294901760
    %v1557 = vsub.f32 %v917, %v1556
    %1558 = vmatpush.msra.mxu0 %v1557
    %v1559 = vand.u32 %v916, 4294901760
    %v1560 = vsub.f32 %v916, %v1559
    %1561 = vmatpush.msra.mxu0 %v1560
    %v1562 = vand.u32 %v915, 4294901760
    %v1563 = vsub.f32 %v915, %v1562
    %1564 = vmatpush.msra.mxu0 %v1563
    %v1565 = vand.u32 %v914, 4294901760
    %v1566 = vsub.f32 %v914, %v1565
    %1567 = vmatpush.msra.mxu0 %v1566
    %v1568 = vand.u32 %v913, 4294901760
    %v1569 = vsub.f32 %v913, %v1568
    %1570 = vmatpush.msra.mxu0 %v1569
    %v1571 = vand.u32 %v1367, 4294901760
    %v1572 = vsub.f32 %v1367, %v1571
    %1573 = vmatmul.f32.gmra.mxu0 %v1572
    %v1574 = vpop.f32.mrf.mxu0
    %v1575 = vadd.f32 %v1517, %v1574
    %v1576 = vand.u32 %v1368, 4294901760
    %v1577 = vsub.f32 %v1368, %v1576
    %1578 = vmatmul.f32.gmra.mxu0 %v1577
    %v1579 = vpop.f32.mrf.mxu0
    %v1580 = vadd.f32 %v1521, %v1579
    %1581 = vdwg.mxu0
    %v1582 = vand.u32 %v928, 4294901760
    %1583 = vmatpush.msra.mxu0 %v1582
    %v1584 = vand.u32 %v927, 4294901760
    %1585 = vmatpush.msra.mxu0 %v1584
    %v1586 = vand.u32 %v926, 4294901760
    %1587 = vmatpush.msra.mxu0 %v1586
    %v1588 = vand.u32 %v925, 4294901760
    %1589 = vmatpush.msra.mxu0 %v1588
    %v1590 = vand.u32 %v924, 4294901760
    %1591 = vmatpush.msra.mxu0 %v1590
    %v1592 = vand.u32 %v923, 4294901760
    %1593 = vmatpush.msra.mxu0 %v1592
    %v1594 = vand.u32 %v922, 4294901760
    %1595 = vmatpush.msra.mxu0 %v1594
    %v1596 = vand.u32 %v921, 4294901760
    %1597 = vmatpush.msra.mxu0 %v1596
    %v1598 = vand.u32 %v920, 4294901760
    %1599 = vmatpush.msra.mxu0 %v1598
    %v1600 = vand.u32 %v919, 4294901760
    %1601 = vmatpush.msra.mxu0 %v1600
    %v1602 = vand.u32 %v918, 4294901760
    %1603 = vmatpush.msra.mxu0 %v1602
    %v1604 = vand.u32 %v917, 4294901760
    %1605 = vmatpush.msra.mxu0 %v1604
    %v1606 = vand.u32 %v916, 4294901760
    %1607 = vmatpush.msra.mxu0 %v1606
    %v1608 = vand.u32 %v915, 4294901760
    %1609 = vmatpush.msra.mxu0 %v1608
    %v1610 = vand.u32 %v914, 4294901760
    %1611 = vmatpush.msra.mxu0 %v1610
    %v1612 = vand.u32 %v913, 4294901760
    %1613 = vmatpush.msra.mxu0 %v1612
    %v1614 = vand.u32 %v1367, 4294901760
    %v1615 = vsub.f32 %v1367, %v1614
    %v1616 = vand.u32 %v1615, 4294901760
    %1617 = vmatmul.f32.gmra.mxu0 %v1616
    %v1618 = vpop.f32.mrf.mxu0
    %v1619 = vadd.f32 %v1575, %v1618
    %v1620 = vand.u32 %v1368, 4294901760
    %v1621 = vsub.f32 %v1368, %v1620
    %v1622 = vand.u32 %v1621, 4294901760
    %1623 = vmatmul.f32.gmra.mxu0 %v1622
    %v1624 = vpop.f32.mrf.mxu0
    %v1625 = vadd.f32 %v1580, %v1624
    %1626 = vdwg.mxu0
    %v1627 = vand.u32 %v928, 4294901760
    %v1628 = vsub.f32 %v928, %v1627
    %v1629 = vand.u32 %v1628, 4294901760
    %1630 = vmatpush.msra.mxu0 %v1629
    %v1631 = vand.u32 %v927, 4294901760
    %v1632 = vsub.f32 %v927, %v1631
    %v1633 = vand.u32 %v1632, 4294901760
    %1634 = vmatpush.msra.mxu0 %v1633
    %v1635 = vand.u32 %v926, 4294901760
    %v1636 = vsub.f32 %v926, %v1635
    %v1637 = vand.u32 %v1636, 4294901760
    %1638 = vmatpush.msra.mxu0 %v1637
    %v1639 = vand.u32 %v925, 4294901760
    %v1640 = vsub.f32 %v925, %v1639
    %v1641 = vand.u32 %v1640, 4294901760
    %1642 = vmatpush.msra.mxu0 %v1641
    %v1643 = vand.u32 %v924, 4294901760
    %v1644 = vsub.f32 %v924, %v1643
    %v1645 = vand.u32 %v1644, 4294901760
    %1646 = vmatpush.msra.mxu0 %v1645
    %v1647 = vand.u32 %v923, 4294901760
    %v1648 = vsub.f32 %v923, %v1647
    %v1649 = vand.u32 %v1648, 4294901760
    %1650 = vmatpush.msra.mxu0 %v1649
    %v1651 = vand.u32 %v922, 4294901760
    %v1652 = vsub.f32 %v922, %v1651
    %v1653 = vand.u32 %v1652, 4294901760
    %1654 = vmatpush.msra.mxu0 %v1653
    %v1655 = vand.u32 %v921, 4294901760
    %v1656 = vsub.f32 %v921, %v1655
    %v1657 = vand.u32 %v1656, 4294901760
    %1658 = vmatpush.msra.mxu0 %v1657
    %v1659 = vand.u32 %v920, 4294901760
    %v1660 = vsub.f32 %v920, %v1659
    %v1661 = vand.u32 %v1660, 4294901760
    %1662 = vmatpush.msra.mxu0 %v1661
    %v1663 = vand.u32 %v919, 4294901760
    %v1664 = vsub.f32 %v919, %v1663
    %v1665 = vand.u32 %v1664, 4294901760
    %1666 = vmatpush.msra.mxu0 %v1665
    %v1667 = vand.u32 %v918, 4294901760
    %v1668 = vsub.f32 %v918, %v1667
    %v1669 = vand.u32 %v1668, 4294901760
    %1670 = vmatpush.msra.mxu0 %v1669
    %v1671 = vand.u32 %v917, 4294901760
    %v1672 = vsub.f32 %v917, %v1671
    %v1673 = vand.u32 %v1672, 4294901760
    %1674 = vmatpush.msra.mxu0 %v1673
    %v1675 = vand.u32 %v916, 4294901760
    %v1676 = vsub.f32 %v916, %v1675
    %v1677 = vand.u32 %v1676, 4294901760
    %1678 = vmatpush.msra.mxu0 %v1677
    %v1679 = vand.u32 %v915, 4294901760
    %v1680 = vsub.f32 %v915, %v1679
    %v1681 = vand.u32 %v1680, 4294901760
    %1682 = vmatpush.msra.mxu0 %v1681
    %v1683 = vand.u32 %v914, 4294901760
    %v1684 = vsub.f32 %v914, %v1683
    %v1685 = vand.u32 %v1684, 4294901760
    %1686 = vmatpush.msra.mxu0 %v1685
    %v1687 = vand.u32 %v913, 4294901760
    %v1688 = vsub.f32 %v913, %v1687
    %v1689 = vand.u32 %v1688, 4294901760
    %1690 = vmatpush.msra.mxu0 %v1689
    %v1691 = vand.u32 %v1367, 4294901760
    %1692 = vmatmul.f32.gmra.mxu0 %v1691
    %v1693 = vpop.f32.mrf.mxu0
    %v1694 = vadd.f32 %v1619, %v1693
    %v1695 = vand.u32 %v1368, 4294901760
    %1696 = vmatmul.f32.gmra.mxu0 %v1695
    %v1697 = vpop.f32.mrf.mxu0
    %v1698 = vadd.f32 %v1625, %v1697
    %1699 = vdwg.mxu0
    %v1700 = vand.u32 %v928, 4294901760
    %1701 = vmatpush.msra.mxu0 %v1700
    %v1702 = vand.u32 %v927, 4294901760
    %1703 = vmatpush.msra.mxu0 %v1702
    %v1704 = vand.u32 %v926, 4294901760
    %1705 = vmatpush.msra.mxu0 %v1704
    %v1706 = vand.u32 %v925, 4294901760
    %1707 = vmatpush.msra.mxu0 %v1706
    %v1708 = vand.u32 %v924, 4294901760
    %1709 = vmatpush.msra.mxu0 %v1708
    %v1710 = vand.u32 %v923, 4294901760
    %1711 = vmatpush.msra.mxu0 %v1710
    %v1712 = vand.u32 %v922, 4294901760
    %1713 = vmatpush.msra.mxu0 %v1712
    %v1714 = vand.u32 %v921, 4294901760
    %1715 = vmatpush.msra.mxu0 %v1714
    %v1716 = vand.u32 %v920, 4294901760
    %1717 = vmatpush.msra.mxu0 %v1716
    %v1718 = vand.u32 %v919, 4294901760
    %1719 = vmatpush.msra.mxu0 %v1718
    %v1720 = vand.u32 %v918, 4294901760
    %1721 = vmatpush.msra.mxu0 %v1720
    %v1722 = vand.u32 %v917, 4294901760
    %1723 = vmatpush.msra.mxu0 %v1722
    %v1724 = vand.u32 %v916, 4294901760
    %1725 = vmatpush.msra.mxu0 %v1724
    %v1726 = vand.u32 %v915, 4294901760
    %1727 = vmatpush.msra.mxu0 %v1726
    %v1728 = vand.u32 %v914, 4294901760
    %1729 = vmatpush.msra.mxu0 %v1728
    %v1730 = vand.u32 %v913, 4294901760
    %1731 = vmatpush.msra.mxu0 %v1730
    %v1732 = vand.u32 %v1367, 4294901760
    %1733 = vmatmul.f32.gmra.mxu0 %v1732
    %v1734 = vpop.f32.mrf.mxu0
    %v1735 = vadd.f32 %v1694, %v1734
    %v1736 = vand.u32 %v1368, 4294901760
    %1737 = vmatmul.f32.gmra.mxu0 %v1736
    %v1738 = vpop.f32.mrf.mxu0
    %v1739 = vadd.f32 %v1698, %v1738
    %1740 = vdwg.mxu0
    %v1741 = vand.u32 %v894, 4294901760
    %1742 = vmatpush.msra.mxu0 %v1741
    %v1743 = vand.u32 %v893, 4294901760
    %1744 = vmatpush.msra.mxu0 %v1743
    %v1745 = vand.u32 %v892, 4294901760
    %1746 = vmatpush.msra.mxu0 %v1745
    %v1747 = vand.u32 %v891, 4294901760
    %1748 = vmatpush.msra.mxu0 %v1747
    %v1749 = vand.u32 %v890, 4294901760
    %1750 = vmatpush.msra.mxu0 %v1749
    %v1751 = vand.u32 %v889, 4294901760
    %1752 = vmatpush.msra.mxu0 %v1751
    %v1753 = vand.u32 %v888, 4294901760
    %1754 = vmatpush.msra.mxu0 %v1753
    %v1755 = vand.u32 %v887, 4294901760
    %1756 = vmatpush.msra.mxu0 %v1755
    %v1757 = vand.u32 %v886, 4294901760
    %1758 = vmatpush.msra.mxu0 %v1757
    %v1759 = vand.u32 %v885, 4294901760
    %1760 = vmatpush.msra.mxu0 %v1759
    %v1761 = vand.u32 %v884, 4294901760
    %1762 = vmatpush.msra.mxu0 %v1761
    %v1763 = vand.u32 %v883, 4294901760
    %1764 = vmatpush.msra.mxu0 %v1763
    %v1765 = vand.u32 %v882, 4294901760
    %1766 = vmatpush.msra.mxu0 %v1765
    %v1767 = vand.u32 %v881, 4294901760
    %1768 = vmatpush.msra.mxu0 %v1767
    %v1769 = vand.u32 %v880, 4294901760
    %1770 = vmatpush.msra.mxu0 %v1769
    %v1771 = vand.u32 %v879, 4294901760
    %1772 = vmatpush.msra.mxu0 %v1771
    %v1773 = vand.u32 %v1367, 4294901760
    %v1774 = vsub.f32 %v1367, %v1773
    %v1775 = vand.u32 %v1774, 4294901760
    %v1776 = vsub.f32 %v1774, %v1775
    %v1777 = vand.u32 %v1776, 4294901760
    %1778 = vmatmul.f32.gmra.mxu0 %v1777
    %v1779 = vpop.f32.mrf.mxu0
    %v1780 = vadd.f32 0.0, %v1779
    %v1781 = vand.u32 %v1368, 4294901760
    %v1782 = vsub.f32 %v1368, %v1781
    %v1783 = vand.u32 %v1782, 4294901760
    %v1784 = vsub.f32 %v1782, %v1783
    %v1785 = vand.u32 %v1784, 4294901760
    %1786 = vmatmul.f32.gmra.mxu0 %v1785
    %v1787 = vpop.f32.mrf.mxu0
    %v1788 = vadd.f32 0.0, %v1787
    %1789 = vdwg.mxu0
    %v1790 = vand.u32 %v894, 4294901760
    %v1791 = vsub.f32 %v894, %v1790
    %v1792 = vand.u32 %v1791, 4294901760
    %v1793 = vsub.f32 %v1791, %v1792
    %v1794 = vand.u32 %v1793, 4294901760
    %1795 = vmatpush.msra.mxu0 %v1794
    %v1796 = vand.u32 %v893, 4294901760
    %v1797 = vsub.f32 %v893, %v1796
    %v1798 = vand.u32 %v1797, 4294901760
    %v1799 = vsub.f32 %v1797, %v1798
    %v1800 = vand.u32 %v1799, 4294901760
    %1801 = vmatpush.msra.mxu0 %v1800
    %v1802 = vand.u32 %v892, 4294901760
    %v1803 = vsub.f32 %v892, %v1802
    %v1804 = vand.u32 %v1803, 4294901760
    %v1805 = vsub.f32 %v1803, %v1804
    %v1806 = vand.u32 %v1805, 4294901760
    %1807 = vmatpush.msra.mxu0 %v1806
    %v1808 = vand.u32 %v891, 4294901760
    %v1809 = vsub.f32 %v891, %v1808
    %v1810 = vand.u32 %v1809, 4294901760
    %v1811 = vsub.f32 %v1809, %v1810
    %v1812 = vand.u32 %v1811, 4294901760
    %1813 = vmatpush.msra.mxu0 %v1812
    %v1814 = vand.u32 %v890, 4294901760
    %v1815 = vsub.f32 %v890, %v1814
    %v1816 = vand.u32 %v1815, 4294901760
    %v1817 = vsub.f32 %v1815, %v1816
    %v1818 = vand.u32 %v1817, 4294901760
    %1819 = vmatpush.msra.mxu0 %v1818
    %v1820 = vand.u32 %v889, 4294901760
    %v1821 = vsub.f32 %v889, %v1820
    %v1822 = vand.u32 %v1821, 4294901760
    %v1823 = vsub.f32 %v1821, %v1822
    %v1824 = vand.u32 %v1823, 4294901760
    %1825 = vmatpush.msra.mxu0 %v1824
    %v1826 = vand.u32 %v888, 4294901760
    %v1827 = vsub.f32 %v888, %v1826
    %v1828 = vand.u32 %v1827, 4294901760
    %v1829 = vsub.f32 %v1827, %v1828
    %v1830 = vand.u32 %v1829, 4294901760
    %1831 = vmatpush.msra.mxu0 %v1830
    %v1832 = vand.u32 %v887, 4294901760
    %v1833 = vsub.f32 %v887, %v1832
    %v1834 = vand.u32 %v1833, 4294901760
    %v1835 = vsub.f32 %v1833, %v1834
    %v1836 = vand.u32 %v1835, 4294901760
    %1837 = vmatpush.msra.mxu0 %v1836
    %v1838 = vand.u32 %v886, 4294901760
    %v1839 = vsub.f32 %v886, %v1838
    %v1840 = vand.u32 %v1839, 4294901760
    %v1841 = vsub.f32 %v1839, %v1840
    %v1842 = vand.u32 %v1841, 4294901760
    %1843 = vmatpush.msra.mxu0 %v1842
    %v1844 = vand.u32 %v885, 4294901760
    %v1845 = vsub.f32 %v885, %v1844
    %v1846 = vand.u32 %v1845, 4294901760
    %v1847 = vsub.f32 %v1845, %v1846
    %v1848 = vand.u32 %v1847, 4294901760
    %1849 = vmatpush.msra.mxu0 %v1848
    %v1850 = vand.u32 %v884, 4294901760
    %v1851 = vsub.f32 %v884, %v1850
    %v1852 = vand.u32 %v1851, 4294901760
    %v1853 = vsub.f32 %v1851, %v1852
    %v1854 = vand.u32 %v1853, 4294901760
    %1855 = vmatpush.msra.mxu0 %v1854
    %v1856 = vand.u32 %v883, 4294901760
    %v1857 = vsub.f32 %v883, %v1856
    %v1858 = vand.u32 %v1857, 4294901760
    %v1859 = vsub.f32 %v1857, %v1858
    %v1860 = vand.u32 %v1859, 4294901760
    %1861 = vmatpush.msra.mxu0 %v1860
    %v1862 = vand.u32 %v882, 4294901760
    %v1863 = vsub.f32 %v882, %v1862
    %v1864 = vand.u32 %v1863, 4294901760
    %v1865 = vsub.f32 %v1863, %v1864
    %v1866 = vand.u32 %v1865, 4294901760
    %1867 = vmatpush.msra.mxu0 %v1866
    %v1868 = vand.u32 %v881, 4294901760
    %v1869 = vsub.f32 %v881, %v1868
    %v1870 = vand.u32 %v1869, 4294901760
    %v1871 = vsub.f32 %v1869, %v1870
    %v1872 = vand.u32 %v1871, 4294901760
    %1873 = vmatpush.msra.mxu0 %v1872
    %v1874 = vand.u32 %v880, 4294901760
    %v1875 = vsub.f32 %v880, %v1874
    %v1876 = vand.u32 %v1875, 4294901760
    %v1877 = vsub.f32 %v1875, %v1876
    %v1878 = vand.u32 %v1877, 4294901760
    %1879 = vmatpush.msra.mxu0 %v1878
    %v1880 = vand.u32 %v879, 4294901760
    %v1881 = vsub.f32 %v879, %v1880
    %v1882 = vand.u32 %v1881, 4294901760
    %v1883 = vsub.f32 %v1881, %v1882
    %v1884 = vand.u32 %v1883, 4294901760
    %1885 = vmatpush.msra.mxu0 %v1884
    %v1886 = vand.u32 %v1367, 4294901760
    %1887 = vmatmul.f32.gmra.mxu0 %v1886
    %v1888 = vpop.f32.mrf.mxu0
    %v1889 = vadd.f32 %v1780, %v1888
    %v1890 = vand.u32 %v1368, 4294901760
    %1891 = vmatmul.f32.gmra.mxu0 %v1890
    %v1892 = vpop.f32.mrf.mxu0
    %v1893 = vadd.f32 %v1788, %v1892
    %1894 = vdwg.mxu0
    %v1895 = vand.u32 %v894, 4294901760
    %v1896 = vsub.f32 %v894, %v1895
    %1897 = vmatpush.msra.mxu0 %v1896
    %v1898 = vand.u32 %v893, 4294901760
    %v1899 = vsub.f32 %v893, %v1898
    %1900 = vmatpush.msra.mxu0 %v1899
    %v1901 = vand.u32 %v892, 4294901760
    %v1902 = vsub.f32 %v892, %v1901
    %1903 = vmatpush.msra.mxu0 %v1902
    %v1904 = vand.u32 %v891, 4294901760
    %v1905 = vsub.f32 %v891, %v1904
    %1906 = vmatpush.msra.mxu0 %v1905
    %v1907 = vand.u32 %v890, 4294901760
    %v1908 = vsub.f32 %v890, %v1907
    %1909 = vmatpush.msra.mxu0 %v1908
    %v1910 = vand.u32 %v889, 4294901760
    %v1911 = vsub.f32 %v889, %v1910
    %1912 = vmatpush.msra.mxu0 %v1911
    %v1913 = vand.u32 %v888, 4294901760
    %v1914 = vsub.f32 %v888, %v1913
    %1915 = vmatpush.msra.mxu0 %v1914
    %v1916 = vand.u32 %v887, 4294901760
    %v1917 = vsub.f32 %v887, %v1916
    %1918 = vmatpush.msra.mxu0 %v1917
    %v1919 = vand.u32 %v886, 4294901760
    %v1920 = vsub.f32 %v886, %v1919
    %1921 = vmatpush.msra.mxu0 %v1920
    %v1922 = vand.u32 %v885, 4294901760
    %v1923 = vsub.f32 %v885, %v1922
    %1924 = vmatpush.msra.mxu0 %v1923
    %v1925 = vand.u32 %v884, 4294901760
    %v1926 = vsub.f32 %v884, %v1925
    %1927 = vmatpush.msra.mxu0 %v1926
    %v1928 = vand.u32 %v883, 4294901760
    %v1929 = vsub.f32 %v883, %v1928
    %1930 = vmatpush.msra.mxu0 %v1929
    %v1931 = vand.u32 %v882, 4294901760
    %v1932 = vsub.f32 %v882, %v1931
    %1933 = vmatpush.msra.mxu0 %v1932
    %v1934 = vand.u32 %v881, 4294901760
    %v1935 = vsub.f32 %v881, %v1934
    %1936 = vmatpush.msra.mxu0 %v1935
    %v1937 = vand.u32 %v880, 4294901760
    %v1938 = vsub.f32 %v880, %v1937
    %1939 = vmatpush.msra.mxu0 %v1938
    %v1940 = vand.u32 %v879, 4294901760
    %v1941 = vsub.f32 %v879, %v1940
    %1942 = vmatpush.msra.mxu0 %v1941
    %v1943 = vand.u32 %v1367, 4294901760
    %v1944 = vsub.f32 %v1367, %v1943
    %1945 = vmatmul.f32.gmra.mxu0 %v1944
    %v1946 = vpop.f32.mrf.mxu0
    %v1947 = vadd.f32 %v1889, %v1946
    %v1948 = vand.u32 %v1368, 4294901760
    %v1949 = vsub.f32 %v1368, %v1948
    %1950 = vmatmul.f32.gmra.mxu0 %v1949
    %v1951 = vpop.f32.mrf.mxu0
    %v1952 = vadd.f32 %v1893, %v1951
    %1953 = vdwg.mxu0
    %v1954 = vand.u32 %v894, 4294901760
    %1955 = vmatpush.msra.mxu0 %v1954
    %v1956 = vand.u32 %v893, 4294901760
    %1957 = vmatpush.msra.mxu0 %v1956
    %v1958 = vand.u32 %v892, 4294901760
    %1959 = vmatpush.msra.mxu0 %v1958
    %v1960 = vand.u32 %v891, 4294901760
    %1961 = vmatpush.msra.mxu0 %v1960
    %v1962 = vand.u32 %v890, 4294901760
    %1963 = vmatpush.msra.mxu0 %v1962
    %v1964 = vand.u32 %v889, 4294901760
    %1965 = vmatpush.msra.mxu0 %v1964
    %v1966 = vand.u32 %v888, 4294901760
    %1967 = vmatpush.msra.mxu0 %v1966
    %v1968 = vand.u32 %v887, 4294901760
    %1969 = vmatpush.msra.mxu0 %v1968
    %v1970 = vand.u32 %v886, 4294901760
    %1971 = vmatpush.msra.mxu0 %v1970
    %v1972 = vand.u32 %v885, 4294901760
    %1973 = vmatpush.msra.mxu0 %v1972
    %v1974 = vand.u32 %v884, 4294901760
    %1975 = vmatpush.msra.mxu0 %v1974
    %v1976 = vand.u32 %v883, 4294901760
    %1977 = vmatpush.msra.mxu0 %v1976
    %v1978 = vand.u32 %v882, 4294901760
    %1979 = vmatpush.msra.mxu0 %v1978
    %v1980 = vand.u32 %v881, 4294901760
    %1981 = vmatpush.msra.mxu0 %v1980
    %v1982 = vand.u32 %v880, 4294901760
    %1983 = vmatpush.msra.mxu0 %v1982
    %v1984 = vand.u32 %v879, 4294901760
    %1985 = vmatpush.msra.mxu0 %v1984
    %v1986 = vand.u32 %v1367, 4294901760
    %v1987 = vsub.f32 %v1367, %v1986
    %v1988 = vand.u32 %v1987, 4294901760
    %1989 = vmatmul.f32.gmra.mxu0 %v1988
    %v1990 = vpop.f32.mrf.mxu0
    %v1991 = vadd.f32 %v1947, %v1990
    %v1992 = vand.u32 %v1368, 4294901760
    %v1993 = vsub.f32 %v1368, %v1992
    %v1994 = vand.u32 %v1993, 4294901760
    %1995 = vmatmul.f32.gmra.mxu0 %v1994
    %v1996 = vpop.f32.mrf.mxu0
    %v1997 = vadd.f32 %v1952, %v1996
    %1998 = vdwg.mxu0
    %v1999 = vand.u32 %v894, 4294901760
    %v2000 = vsub.f32 %v894, %v1999
    %v2001 = vand.u32 %v2000, 4294901760
    %2002 = vmatpush.msra.mxu0 %v2001
    %v2003 = vand.u32 %v893, 4294901760
    %v2004 = vsub.f32 %v893, %v2003
    %v2005 = vand.u32 %v2004, 4294901760
    %2006 = vmatpush.msra.mxu0 %v2005
    %v2007 = vand.u32 %v892, 4294901760
    %v2008 = vsub.f32 %v892, %v2007
    %v2009 = vand.u32 %v2008, 4294901760
    %2010 = vmatpush.msra.mxu0 %v2009
    %v2011 = vand.u32 %v891, 4294901760
    %v2012 = vsub.f32 %v891, %v2011
    %v2013 = vand.u32 %v2012, 4294901760
    %2014 = vmatpush.msra.mxu0 %v2013
    %v2015 = vand.u32 %v890, 4294901760
    %v2016 = vsub.f32 %v890, %v2015
    %v2017 = vand.u32 %v2016, 4294901760
    %2018 = vmatpush.msra.mxu0 %v2017
    %v2019 = vand.u32 %v889, 4294901760
    %v2020 = vsub.f32 %v889, %v2019
    %v2021 = vand.u32 %v2020, 4294901760
    %2022 = vmatpush.msra.mxu0 %v2021
    %v2023 = vand.u32 %v888, 4294901760
    %v2024 = vsub.f32 %v888, %v2023
    %v2025 = vand.u32 %v2024, 4294901760
    %2026 = vmatpush.msra.mxu0 %v2025
    %v2027 = vand.u32 %v887, 4294901760
    %v2028 = vsub.f32 %v887, %v2027
    %v2029 = vand.u32 %v2028, 4294901760
    %2030 = vmatpush.msra.mxu0 %v2029
    %v2031 = vand.u32 %v886, 4294901760
    %v2032 = vsub.f32 %v886, %v2031
    %v2033 = vand.u32 %v2032, 4294901760
    %2034 = vmatpush.msra.mxu0 %v2033
    %v2035 = vand.u32 %v885, 4294901760
    %v2036 = vsub.f32 %v885, %v2035
    %v2037 = vand.u32 %v2036, 4294901760
    %2038 = vmatpush.msra.mxu0 %v2037
    %v2039 = vand.u32 %v884, 4294901760
    %v2040 = vsub.f32 %v884, %v2039
    %v2041 = vand.u32 %v2040, 4294901760
    %2042 = vmatpush.msra.mxu0 %v2041
    %v2043 = vand.u32 %v883, 4294901760
    %v2044 = vsub.f32 %v883, %v2043
    %v2045 = vand.u32 %v2044, 4294901760
    %2046 = vmatpush.msra.mxu0 %v2045
    %v2047 = vand.u32 %v882, 4294901760
    %v2048 = vsub.f32 %v882, %v2047
    %v2049 = vand.u32 %v2048, 4294901760
    %2050 = vmatpush.msra.mxu0 %v2049
    %v2051 = vand.u32 %v881, 4294901760
    %v2052 = vsub.f32 %v881, %v2051
    %v2053 = vand.u32 %v2052, 4294901760
    %2054 = vmatpush.msra.mxu0 %v2053
    %v2055 = vand.u32 %v880, 4294901760
    %v2056 = vsub.f32 %v880, %v2055
    %v2057 = vand.u32 %v2056, 4294901760
    %2058 = vmatpush.msra.mxu0 %v2057
    %v2059 = vand.u32 %v879, 4294901760
    %v2060 = vsub.f32 %v879, %v2059
    %v2061 = vand.u32 %v2060, 4294901760
    %2062 = vmatpush.msra.mxu0 %v2061
    %v2063 = vand.u32 %v1367, 4294901760
    %2064 = vmatmul.f32.gmra.mxu0 %v2063
    %v2065 = vpop.f32.mrf.mxu0
    %v2066 = vadd.f32 %v1991, %v2065
    %v2067 = vand.u32 %v1368, 4294901760
    %2068 = vmatmul.f32.gmra.mxu0 %v2067
    %v2069 = vpop.f32.mrf.mxu0
    %v2070 = vadd.f32 %v1997, %v2069
    %2071 = vdwg.mxu0
    %v2072 = vand.u32 %v894, 4294901760
    %2073 = vmatpush.msra.mxu0 %v2072
    %v2074 = vand.u32 %v893, 4294901760
    %2075 = vmatpush.msra.mxu0 %v2074
    %v2076 = vand.u32 %v892, 4294901760
    %2077 = vmatpush.msra.mxu0 %v2076
    %v2078 = vand.u32 %v891, 4294901760
    %2079 = vmatpush.msra.mxu0 %v2078
    %v2080 = vand.u32 %v890, 4294901760
    %2081 = vmatpush.msra.mxu0 %v2080
    %v2082 = vand.u32 %v889, 4294901760
    %2083 = vmatpush.msra.mxu0 %v2082
    %v2084 = vand.u32 %v888, 4294901760
    %2085 = vmatpush.msra.mxu0 %v2084
    %v2086 = vand.u32 %v887, 4294901760
    %2087 = vmatpush.msra.mxu0 %v2086
    %v2088 = vand.u32 %v886, 4294901760
    %2089 = vmatpush.msra.mxu0 %v2088
    %v2090 = vand.u32 %v885, 4294901760
    %2091 = vmatpush.msra.mxu0 %v2090
    %v2092 = vand.u32 %v884, 4294901760
    %2093 = vmatpush.msra.mxu0 %v2092
    %v2094 = vand.u32 %v883, 4294901760
    %2095 = vmatpush.msra.mxu0 %v2094
    %v2096 = vand.u32 %v882, 4294901760
    %2097 = vmatpush.msra.mxu0 %v2096
    %v2098 = vand.u32 %v881, 4294901760
    %2099 = vmatpush.msra.mxu0 %v2098
    %v2100 = vand.u32 %v880, 4294901760
    %2101 = vmatpush.msra.mxu0 %v2100
    %v2102 = vand.u32 %v879, 4294901760
    %2103 = vmatpush.msra.mxu0 %v2102
    %v2104 = vand.u32 %v1367, 4294901760
    %2105 = vmatmul.f32.gmra.mxu0 %v2104
    %v2106 = vpop.f32.mrf.mxu0
    %v2107 = vadd.f32 %v2066, %v2106
    %v2108 = vand.u32 %v1368, 4294901760
    %2109 = vmatmul.f32.gmra.mxu0 %v2108
    %v2110 = vpop.f32.mrf.mxu0
    %v2111 = vadd.f32 %v2070, %v2110
    %2112 = vdwg.mxu0
    %v2113 = vrcp.pop %v2107
    %v2114 = vmul.f32 %v2107, %v2113
    %v2115 = vsub.f32 1.0, %v2114
    %v2116 = vmul.f32 %v2113, %v2115
    %v2117 = vadd.f32 %v2113, %v2116
    %vm2118 = vweird.f32 %v2107
    %vm2119 = vweird.f32 %v2113
    %vm2120 = vmor %vm2118, %vm2119
    %v2121 = vsel %vm2120, %v2113, %v2117
    %v2122 = vand.u32 2147483647, %v2107
    %vm2123 = vcmp.eq.f32.partialorder %v2122, 8.507059e+37
    %v2124 = vand.u32 %v2107, 2147483648
    %v2125 = vor.u32 1.1754944e-38, %v2124
    %v2126 = vsel %vm2123, %v2125, %v2121
    %v2127 = vmul.f32 %v1735, %v2126
    %v2128 = vrcp.pop %v2111
    %v2129 = vmul.f32 %v2111, %v2128
    %v2130 = vsub.f32 1.0, %v2129
    %v2131 = vmul.f32 %v2128, %v2130
    %v2132 = vadd.f32 %v2128, %v2131
    %vm2133 = vweird.f32 %v2111
    %vm2134 = vweird.f32 %v2128
    %vm2135 = vmor %vm2133, %vm2134
    %v2136 = vsel %vm2135, %v2128, %v2132
    %v2137 = vand.u32 2147483647, %v2111
    %vm2138 = vcmp.eq.f32.partialorder %v2137, 8.507059e+37
    %v2139 = vand.u32 %v2111, 2147483648
    %v2140 = vor.u32 1.1754944e-38, %v2139
    %v2141 = vsel %vm2138, %v2140, %v2136
    %v2142 = vmul.f32 %v1739, %v2141
    %v2143 = vadd.f32 %v2127, %v337
    %v2144 = vadd.f32 %v2142, %v341
    %v2145 = vsel %vm68, %v2143, 0.0
    %v2146 = vrot.slane %v2145, 4
    %v2147 = vadd.f32 %v2145, %v2146
    %v2148 = vrot.slane %v2147, 2
    %v2149 = vadd.f32 %v2147, %v2148
    %v2150 = vrot.slane %v2149, 1
    %v2151 = vadd.f32 %v2149, %v2150
    %v2152 = vsel %vm68, %v2144, 0.0
    %v2153 = vrot.slane %v2152, 4
    %v2154 = vadd.f32 %v2152, %v2153
    %v2155 = vrot.slane %v2154, 2
    %v2156 = vadd.f32 %v2154, %v2155
    %v2157 = vrot.slane %v2156, 1
    %v2158 = vadd.f32 %v2156, %v2157
    %v2159 = vld [vmem:[#allocation2 + $0xc0] sm:$0xff]
    %v2160 = vld [vmem:[#allocation2 + $0xd8] sm:$0xff]
    %v2161 = vld [vmem:[#allocation2 + $0xf0] sm:$0xff]
    %v2162 = vld [vmem:[#allocation2 + $0x108] sm:$0xff]
    %v2163 = vld [vmem:[#allocation2 + $0x120] sm:$0xff]
    %v2164 = vld [vmem:[#allocation2 + $0x138] sm:$0xff]
    %v2165 = vld [vmem:[#allocation2 + $0x150] sm:$0xff]
    %v2166 = vld [vmem:[#allocation2 + $0x168] sm:$0xff]
    %v2167 = vld [vmem:[#allocation2 + $0x180] ss:$0 sm:$0xff]
    %vm2170 = vcmask 1041409
    %v2171 = vsel %vm2170, %v2158, %v2151
    %v2172 = vsel %vm68, %v2171, 0
    %2174 = vmatpush.msra.mxu0 0.0
    %2175 = vmatpush.msra.mxu0 0.0
    %2176 = vmatpush.msra.mxu0 0.0
    %2177 = vmatpush.msra.mxu0 0.0
    %2178 = vmatpush.msra.mxu0 0.0
    %2179 = vmatpush.msra.mxu0 0.0
    %2180 = vmatpush.msra.mxu0 0.0
    %2181 = vmatpush.msra.mxu0 0.0
    %v2182 = vand.u32 %v2166, 4294901760
    %2183 = vmatpush.msra.mxu0 %v2182
    %v2184 = vand.u32 %v2165, 4294901760
    %2185 = vmatpush.msra.mxu0 %v2184
    %v2186 = vand.u32 %v2164, 4294901760
    %2187 = vmatpush.msra.mxu0 %v2186
    %v2188 = vand.u32 %v2163, 4294901760
    %2189 = vmatpush.msra.mxu0 %v2188
    %v2190 = vand.u32 %v2162, 4294901760
    %2191 = vmatpush.msra.mxu0 %v2190
    %v2192 = vand.u32 %v2161, 4294901760
    %2193 = vmatpush.msra.mxu0 %v2192
    %v2194 = vand.u32 %v2160, 4294901760
    %2195 = vmatpush.msra.mxu0 %v2194
    %v2196 = vand.u32 %v2159, 4294901760
    %2197 = vmatpush.msra.mxu0 %v2196
    %v2198 = vand.u32 %v2172, 4294901760
    %v2199 = vsub.f32 %v2172, %v2198
    %v2200 = vand.u32 %v2199, 4294901760
    %v2201 = vsub.f32 %v2199, %v2200
    %v2202 = vand.u32 %v2201, 4294901760
    %2203 = vmatmul.f32.gmra.mxu0 %v2202
    %v2204 = vpop.f32.mrf.mxu0
    %v2205 = vadd.f32 %v2167, %v2204
    %2206 = vdwg.mxu0
    %2207 = vmatpush.msra.mxu0 0.0
    %2208 = vmatpush.msra.mxu0 0.0
    %2209 = vmatpush.msra.mxu0 0.0
    %2210 = vmatpush.msra.mxu0 0.0
    %2211 = vmatpush.msra.mxu0 0.0
    %2212 = vmatpush.msra.mxu0 0.0
    %2213 = vmatpush.msra.mxu0 0.0
    %2214 = vmatpush.msra.mxu0 0.0
    %v2215 = vand.u32 %v2166, 4294901760
    %v2216 = vsub.f32 %v2166, %v2215
    %v2217 = vand.u32 %v2216, 4294901760
    %v2218 = vsub.f32 %v2216, %v2217
    %v2219 = vand.u32 %v2218, 4294901760
    %2220 = vmatpush.msra.mxu0 %v2219
    %v2221 = vand.u32 %v2165, 4294901760
    %v2222 = vsub.f32 %v2165, %v2221
    %v2223 = vand.u32 %v2222, 4294901760
    %v2224 = vsub.f32 %v2222, %v2223
    %v2225 = vand.u32 %v2224, 4294901760
    %2226 = vmatpush.msra.mxu0 %v2225
    %v2227 = vand.u32 %v2164, 4294901760
    %v2228 = vsub.f32 %v2164, %v2227
    %v2229 = vand.u32 %v2228, 4294901760
    %v2230 = vsub.f32 %v2228, %v2229
    %v2231 = vand.u32 %v2230, 4294901760
    %2232 = vmatpush.msra.mxu0 %v2231
    %v2233 = vand.u32 %v2163, 4294901760
    %v2234 = vsub.f32 %v2163, %v2233
    %v2235 = vand.u32 %v2234, 4294901760
    %v2236 = vsub.f32 %v2234, %v2235
    %v2237 = vand.u32 %v2236, 4294901760
    %2238 = vmatpush.msra.mxu0 %v2237
    %v2239 = vand.u32 %v2162, 4294901760
    %v2240 = vsub.f32 %v2162, %v2239
    %v2241 = vand.u32 %v2240, 4294901760
    %v2242 = vsub.f32 %v2240, %v2241
    %v2243 = vand.u32 %v2242, 4294901760
    %2244 = vmatpush.msra.mxu0 %v2243
    %v2245 = vand.u32 %v2161, 4294901760
    %v2246 = vsub.f32 %v2161, %v2245
    %v2247 = vand.u32 %v2246, 4294901760
    %v2248 = vsub.f32 %v2246, %v2247
    %v2249 = vand.u32 %v2248, 4294901760
    %2250 = vmatpush.msra.mxu0 %v2249
    %v2251 = vand.u32 %v2160, 4294901760
    %v2252 = vsub.f32 %v2160, %v2251
    %v2253 = vand.u32 %v2252, 4294901760
    %v2254 = vsub.f32 %v2252, %v2253
    %v2255 = vand.u32 %v2254, 4294901760
    %2256 = vmatpush.msra.mxu0 %v2255
    %v2257 = vand.u32 %v2159, 4294901760
    %v2258 = vsub.f32 %v2159, %v2257
    %v2259 = vand.u32 %v2258, 4294901760
    %v2260 = vsub.f32 %v2258, %v2259
    %v2261 = vand.u32 %v2260, 4294901760
    %2262 = vmatpush.msra.mxu0 %v2261
    %v2263 = vand.u32 %v2172, 4294901760
    %2264 = vmatmul.f32.gmra.mxu0 %v2263
    %v2265 = vpop.f32.mrf.mxu0
    %v2266 = vadd.f32 %v2205, %v2265
    %2267 = vdwg.mxu0
    %2268 = vmatpush.msra.mxu0 0.0
    %2269 = vmatpush.msra.mxu0 0.0
    %2270 = vmatpush.msra.mxu0 0.0
    %2271 = vmatpush.msra.mxu0 0.0
    %2272 = vmatpush.msra.mxu0 0.0
    %2273 = vmatpush.msra.mxu0 0.0
    %2274 = vmatpush.msra.mxu0 0.0
    %2275 = vmatpush.msra.mxu0 0.0
    %v2276 = vand.u32 %v2166, 4294901760
    %v2277 = vsub.f32 %v2166, %v2276
    %2278 = vmatpush.msra.mxu0 %v2277
    %v2279 = vand.u32 %v2165, 4294901760
    %v2280 = vsub.f32 %v2165, %v2279
    %2281 = vmatpush.msra.mxu0 %v2280
    %v2282 = vand.u32 %v2164, 4294901760
    %v2283 = vsub.f32 %v2164, %v2282
    %2284 = vmatpush.msra.mxu0 %v2283
    %v2285 = vand.u32 %v2163, 4294901760
    %v2286 = vsub.f32 %v2163, %v2285
    %2287 = vmatpush.msra.mxu0 %v2286
    %v2288 = vand.u32 %v2162, 4294901760
    %v2289 = vsub.f32 %v2162, %v2288
    %2290 = vmatpush.msra.mxu0 %v2289
    %v2291 = vand.u32 %v2161, 4294901760
    %v2292 = vsub.f32 %v2161, %v2291
    %2293 = vmatpush.msra.mxu0 %v2292
    %v2294 = vand.u32 %v2160, 4294901760
    %v2295 = vsub.f32 %v2160, %v2294
    %2296 = vmatpush.msra.mxu0 %v2295
    %v2297 = vand.u32 %v2159, 4294901760
    %v2298 = vsub.f32 %v2159, %v2297
    %2299 = vmatpush.msra.mxu0 %v2298
    %v2300 = vand.u32 %v2172, 4294901760
    %v2301 = vsub.f32 %v2172, %v2300
    %2302 = vmatmul.f32.gmra.mxu0 %v2301
    %v2303 = vpop.f32.mrf.mxu0
    %v2304 = vadd.f32 %v2266, %v2303
    %2305 = vdwg.mxu0
    %2306 = vmatpush.msra.mxu0 0.0
    %2307 = vmatpush.msra.mxu0 0.0
    %2308 = vmatpush.msra.mxu0 0.0
    %2309 = vmatpush.msra.mxu0 0.0
    %2310 = vmatpush.msra.mxu0 0.0
    %2311 = vmatpush.msra.mxu0 0.0
    %2312 = vmatpush.msra.mxu0 0.0
    %2313 = vmatpush.msra.mxu0 0.0
    %v2314 = vand.u32 %v2166, 4294901760
    %2315 = vmatpush.msra.mxu0 %v2314
    %v2316 = vand.u32 %v2165, 4294901760
    %2317 = vmatpush.msra.mxu0 %v2316
    %v2318 = vand.u32 %v2164, 4294901760
    %2319 = vmatpush.msra.mxu0 %v2318
    %v2320 = vand.u32 %v2163, 4294901760
    %2321 = vmatpush.msra.mxu0 %v2320
    %v2322 = vand.u32 %v2162, 4294901760
    %2323 = vmatpush.msra.mxu0 %v2322
    %v2324 = vand.u32 %v2161, 4294901760
    %2325 = vmatpush.msra.mxu0 %v2324
    %v2326 = vand.u32 %v2160, 4294901760
    %2327 = vmatpush.msra.mxu0 %v2326
    %v2328 = vand.u32 %v2159, 4294901760
    %2329 = vmatpush.msra.mxu0 %v2328
    %v2330 = vand.u32 %v2172, 4294901760
    %v2331 = vsub.f32 %v2172, %v2330
    %v2332 = vand.u32 %v2331, 4294901760
    %2333 = vmatmul.f32.gmra.mxu0 %v2332
    %v2334 = vpop.f32.mrf.mxu0
    %v2335 = vadd.f32 %v2304, %v2334
    %2336 = vdwg.mxu0
    %2337 = vmatpush.msra.mxu0 0.0
    %2338 = vmatpush.msra.mxu0 0.0
    %2339 = vmatpush.msra.mxu0 0.0
    %2340 = vmatpush.msra.mxu0 0.0
    %2341 = vmatpush.msra.mxu0 0.0
    %2342 = vmatpush.msra.mxu0 0.0
    %2343 = vmatpush.msra.mxu0 0.0
    %2344 = vmatpush.msra.mxu0 0.0
    %v2345 = vand.u32 %v2166, 4294901760
    %v2346 = vsub.f32 %v2166, %v2345
    %v2347 = vand.u32 %v2346, 4294901760
    %2348 = vmatpush.msra.mxu0 %v2347
    %v2349 = vand.u32 %v2165, 4294901760
    %v2350 = vsub.f32 %v2165, %v2349
    %v2351 = vand.u32 %v2350, 4294901760
    %2352 = vmatpush.msra.mxu0 %v2351
    %v2353 = vand.u32 %v2164, 4294901760
    %v2354 = vsub.f32 %v2164, %v2353
    %v2355 = vand.u32 %v2354, 4294901760
    %2356 = vmatpush.msra.mxu0 %v2355
    %v2357 = vand.u32 %v2163, 4294901760
    %v2358 = vsub.f32 %v2163, %v2357
    %v2359 = vand.u32 %v2358, 4294901760
    %2360 = vmatpush.msra.mxu0 %v2359
    %v2361 = vand.u32 %v2162, 4294901760
    %v2362 = vsub.f32 %v2162, %v2361
    %v2363 = vand.u32 %v2362, 4294901760
    %2364 = vmatpush.msra.mxu0 %v2363
    %v2365 = vand.u32 %v2161, 4294901760
    %v2366 = vsub.f32 %v2161, %v2365
    %v2367 = vand.u32 %v2366, 4294901760
    %2368 = vmatpush.msra.mxu0 %v2367
    %v2369 = vand.u32 %v2160, 4294901760
    %v2370 = vsub.f32 %v2160, %v2369
    %v2371 = vand.u32 %v2370, 4294901760
    %2372 = vmatpush.msra.mxu0 %v2371
    %v2373 = vand.u32 %v2159, 4294901760
    %v2374 = vsub.f32 %v2159, %v2373
    %v2375 = vand.u32 %v2374, 4294901760
    %2376 = vmatpush.msra.mxu0 %v2375
    %v2377 = vand.u32 %v2172, 4294901760
    %2378 = vmatmul.f32.gmra.mxu0 %v2377
    %v2379 = vpop.f32.mrf.mxu0
    %v2380 = vadd.f32 %v2335, %v2379
    %2381 = vdwg.mxu0
    %2382 = vmatpush.msra.mxu0 0.0
    %2383 = vmatpush.msra.mxu0 0.0
    %2384 = vmatpush.msra.mxu0 0.0
    %2385 = vmatpush.msra.mxu0 0.0
    %2386 = vmatpush.msra.mxu0 0.0
    %2387 = vmatpush.msra.mxu0 0.0
    %2388 = vmatpush.msra.mxu0 0.0
    %2389 = vmatpush.msra.mxu0 0.0
    %v2390 = vand.u32 %v2166, 4294901760
    %2391 = vmatpush.msra.mxu0 %v2390
    %v2392 = vand.u32 %v2165, 4294901760
    %2393 = vmatpush.msra.mxu0 %v2392
    %v2394 = vand.u32 %v2164, 4294901760
    %2395 = vmatpush.msra.mxu0 %v2394
    %v2396 = vand.u32 %v2163, 4294901760
    %2397 = vmatpush.msra.mxu0 %v2396
    %v2398 = vand.u32 %v2162, 4294901760
    %2399 = vmatpush.msra.mxu0 %v2398
    %v2400 = vand.u32 %v2161, 4294901760
    %2401 = vmatpush.msra.mxu0 %v2400
    %v2402 = vand.u32 %v2160, 4294901760
    %2403 = vmatpush.msra.mxu0 %v2402
    %v2404 = vand.u32 %v2159, 4294901760
    %2405 = vmatpush.msra.mxu0 %v2404
    %v2406 = vand.u32 %v2172, 4294901760
    %2407 = vmatmul.f32.gmra.mxu0 %v2406
    %v2408 = vpop.f32.mrf.mxu0
    %v2409 = vadd.f32 %v2380, %v2408
    %2410 = vdwg.mxu0
    %vm2411 = vcmask 123904
    %v2412 = vsel %vm2411, %v2409, -inf
    %2413 = vmax.xlane.f32.xlu0 %v2412
    %v2414 = vpop.xlane.xlu0 %2413
    %v2415 = vsub.f32 %v2409, %v2414
    %v2416 = vmul.f32 %v2415, 1.442695
    %v2417 = vpow.pop %v2416
    %v2418 = vsel %vm2411, %v2417, 0.0
    %2419 = vadd.xlane.f32.xlu0 %v2418
    %v2420 = vpop.xlane.xlu0 %2419
    %v2421 = vrcp.pop %v2420
    %v2422 = vmul.f32 %v2420, %v2421
    %v2423 = vsub.f32 1.0, %v2422
    %v2424 = vmul.f32 %v2421, %v2423
    %v2425 = vadd.f32 %v2421, %v2424
    %vm2426 = vweird.f32 %v2420
    %vm2427 = vweird.f32 %v2421
    %vm2428 = vmor %vm2426, %vm2427
    %v2429 = vsel %vm2428, %v2421, %v2425
    %v2430 = vand.u32 2147483647, %v2420
    %vm2431 = vcmp.eq.f32.partialorder %v2430, 8.507059e+37
    %v2432 = vand.u32 %v2420, 2147483648
    %v2433 = vor.u32 1.1754944e-38, %v2432
    %v2434 = vsel %vm2431, %v2433, %v2429
    %v2435 = vmul.f32 %v2417, %v2434
    %2436 = vst.msk [vmem:[#allocation5] sm:$0x3] %vm2411, %v2435
    // Predicated region
    $region14: #{tpu_custom_call.1} parent=1 // pred_check
      _
    $region15: #{tpu_custom_call.1} parent=1 // pred_check_branch
      %2438 = sbr.rel (0) target = $region17
    $region16: #{tpu_custom_call.1} parent=1 // pred_region
      %2440 = vsyncadd [#allocation4], 0
      %s2442 = sshll.u32 [#allocation5], 4
      %s2443 = int_to_ptr.vmem [resolvable:$true] %s2442
      %s2444 = sshll.u32 %s2, 4
      %s2445 = int_to_ptr.hbm [resolvable:$true] %s2444
      %2447 = dma.vmem_to_hbm [thread:$0]  %s2443, 32, %s2445, [#allocation4]
    $region17: #{tpu_custom_call.1} parent=1 // pred_fallthru
      _
    // Predicated region
    $region18: #{tpu_custom_call.1} parent=1 // pred_check
      _
    $region19: #{tpu_custom_call.1} parent=1 // pred_check_branch
      %2449 = sbr.rel (0) target = $region21
    $region20: #{tpu_custom_call.1} parent=1 // pred_region
      %2451 = dma.done [#allocation4], 32
    $region21: #{tpu_custom_call.1} parent=1 // pred_fallthru
      _
    %2452 = vsyncpa [#allocation3], 1
    %2453 = vsyncpa [#allocation4], 1

</llo_original>
